<compile_context>
chip_gen: v7x
topology: tpu7x:2x2x1
jax: 0.10.0
libtpu: 0.0.40
codegen_flags: <defaults>
</compile_context>

<pallas_src>
import jax
import jax.numpy as jnp
from jax.experimental import pallas as pl
from jax.experimental.pallas import tpu as pltpu


def _flow_head_kernel(x_ref, w1_ref, w2_ref, b2_ref, o_ref, xpad_ref):
    # x_ref   : (1, H, W, Cin)     current batch element, channels-last (Cin on lanes)
    # w1_ref  : (9*Cin, Chid)      conv1 weights, rows ordered (ky, kx, cin)
    # w2_ref  : (Cout, Chid)       conv2 (1x1) weights
    # b2_ref  : (Cout, 1)          conv2 bias
    # o_ref   : (1, Cout, H*W)     lane-dense output block
    # xpad_ref: (H+4, W+4, Cin)    VMEM scratch holding the 2-pixel zero halo
    H, W, Cin = x_ref.shape[1], x_ref.shape[2], x_ref.shape[3]

    # Build the zero-padded tile in VMEM (replaces a wrapper-side jnp.pad HBM pass).
    xpad_ref[...] = jnp.zeros_like(xpad_ref)
    xpad_ref[2:2 + H, 2:2 + W, :] = x_ref[0]
    xp = xpad_ref[...]                                   # (H+4, W+4, Cin)

    # im2col for the dilated (d=2) 3x3 conv: 9 shifted (H, W, Cin) slabs concatenated
    # on the lane (channel) axis; shifts/rotations happen once here, not per matmul.
    taps = [xp[ky * 2:ky * 2 + H, kx * 2:kx * 2 + W, :]
            for ky in range(3) for kx in range(3)]
    cols = jnp.concatenate(taps, axis=-1)                # (H, W, 9*Cin)
    cols = cols.reshape(H * W, 9 * Cin)                  # lane dim unchanged -> cheap

    # conv1 as a single MXU matmul (default precision, f32 accumulate) + ReLU.
    h = jnp.dot(cols, w1_ref[...], preferred_element_type=jnp.float32)
    h = jnp.maximum(h, 0.0)                              # (H*W, Chid)

    # conv2 (1x1) in NT orientation so the result is already (Cout, H*W): lane-dense.
    out_t = jnp.einsum("oc,rc->or", w2_ref[...], h,
                       preferred_element_type=jnp.float32)
    out_t = out_t + b2_ref[...]                          # (Cout, H*W) + (Cout, 1)

    o_ref[0] = out_t.astype(o_ref.dtype)


def flow_head_pallas(x_nchw, conv1_weight, conv2_weight, conv2_bias):
    """FlowHead forward.

    x_nchw       : (N, Cin, H, W)     activations (PyTorch NCHW layout)
    conv1_weight : (Chid, Cin, 3, 3)  PyTorch OIHW; dilation=2, padding=2, no bias
    conv2_weight : (Cout, Chid, 1, 1) PyTorch OIHW 1x1
    conv2_bias   : (Cout,)
    returns      : (N, Cout, H, W)
    """
    N, Cin, H, W = x_nchw.shape
    Chid = conv1_weight.shape[0]
    Cout = conv2_weight.shape[0]
    HW = H * W

    # Channels-last activations (channels on the lane axis feed the MXU contraction).
    x_nhwc = jnp.transpose(x_nchw, (0, 2, 3, 1))

    # conv1 weights -> (9*Cin, Chid) with rows ordered (ky, kx, cin), matching the
    # in-kernel im2col concat order.  conv2 -> (Cout, Chid).  Tiny, one-time cost.
    w1m = jnp.transpose(conv1_weight, (2, 3, 1, 0)).reshape(9 * Cin, Chid)
    w2m = conv2_weight.reshape(Cout, Chid)
    b2m = conv2_bias.reshape(Cout, 1)

    out_flat = pl.pallas_call(
        _flow_head_kernel,
        out_shape=jax.ShapeDtypeStruct((N, Cout, HW), x_nchw.dtype),
        grid_spec=pltpu.PrefetchScalarGridSpec(
            num_scalar_prefetch=0,
            grid=(N,),  # N>=2 keeps both v7x TensorCores busy; per-step work is one matmul chain
            in_specs=[
                pl.BlockSpec((1, H, W, Cin), lambda n: (n, 0, 0, 0)),
                pl.BlockSpec((9 * Cin, Chid), lambda n: (0, 0)),
                pl.BlockSpec((Cout, Chid), lambda n: (0, 0)),
                pl.BlockSpec((Cout, 1), lambda n: (0, 0)),
            ],
            out_specs=pl.BlockSpec((1, Cout, HW), lambda n: (n, 0, 0)),
            scratch_shapes=[pltpu.VMEM((H + 4, W + 4, Cin), jnp.float32)],
        ),
        compiler_params=pltpu.CompilerParams(
            dimension_semantics=("parallel",)),
    )(x_nhwc, w1m, w2m, b2m)

    # (N, Cout, H*W) is contiguous NCHW -> free reshape, no output transpose needed.
    return out_flat.reshape(N, Cout, H, W)


def flow_head_reference(x_nchw, conv1_weight, conv2_weight, conv2_bias):
    """Pure-JAX reference mirroring the PyTorch module semantics."""
    y = jax.lax.conv_general_dilated(
        x_nchw, conv1_weight, window_strides=(1, 1),
        padding=((2, 2), (2, 2)), rhs_dilation=(2, 2),
        dimension_numbers=("NCHW", "OIHW", "NCHW"),
        precision=jax.lax.Precision.HIGHEST)
    y = jnp.maximum(y, 0.0)
    z = jax.lax.conv_general_dilated(
        y, conv2_weight, window_strides=(1, 1), padding="VALID",
        dimension_numbers=("NCHW", "OIHW", "NCHW"),
        precision=jax.lax.Precision.HIGHEST)
    return z + conv2_bias.reshape(1, -1, 1, 1)


if __name__ == "__main__":
    # Small shapes consistent with FlowHead(input_dim, hidden_dim=2*input_dim, output_dim=2).
    N, Cin, H, W = 2, 16, 16, 16
    Chid, Cout = 32, 2

    key = jax.random.PRNGKey(0)
    kx_, k1, k2, kb = jax.random.split(key, 4)

    x = jax.random.normal(kx_, (N, Cin, H, W), jnp.float32)
    w1 = jax.random.normal(k1, (Chid, Cin, 3, 3), jnp.float32) * (1.0 / (3 * 3 * Cin) ** 0.5)
    w2 = jax.random.normal(k2, (Cout, Chid, 1, 1), jnp.float32) * (1.0 / Chid ** 0.5)
    b2 = jax.random.normal(kb, (Cout,), jnp.float32) * 0.1

    out = jax.block_until_ready(flow_head_pallas(x, w1, w2, b2))
    ref = jax.block_until_ready(flow_head_reference(x, w1, w2, b2))

    assert out.shape == (N, Cout, H, W), out.shape
    # Kernel uses default (single-pass) MXU precision per the perf review; the reference
    # uses HIGHEST, so allow bf16-input-rounding-level differences.  Any structural bug
    # (tap offsets, im2col ordering, bias) would produce O(1) errors, far above this.
    max_err = float(jnp.max(jnp.abs(out - ref)))
    assert jnp.allclose(out, ref, atol=3e-2, rtol=3e-2), max_err

    print("KERNEL_OK")
</pallas_src>

<mosaic_0001>
module attributes {stable_mosaic.version = 11 : i64} {
  func.func @_flow_head_kernel(%arg0: i32, %arg1: memref<1x16x16x16xf32, #tpu.memory_space<vmem>>, %arg2: memref<144x32xf32, #tpu.memory_space<vmem>>, %arg3: memref<2x32xf32, #tpu.memory_space<vmem>>, %arg4: memref<2x1xf32, #tpu.memory_space<vmem>>, %arg5: memref<1x2x256xf32, #tpu.memory_space<vmem>>, %arg6: memref<20x20x16xf32, #tpu.memory_space<vmem>>) attributes {dimension_semantics = [#tpu.dimension_semantics<parallel>], iteration_bounds = array<i64: 2>, scalar_prefetch = 0 : i64, scratch_operands = 1 : i64, tpu.core_type = #tpu.core_type<tc>, window_params = [{transform_indices = @transform_0, window_bounds = array<i64: 1, 16, 16, 16>}, {pipeline_mode = #tpu.pipeline_mode<synchronous>, transform_indices = @transform_1, window_bounds = array<i64: 144, 32>}, {pipeline_mode = #tpu.pipeline_mode<synchronous>, transform_indices = @transform_2, window_bounds = array<i64: 2, 32>}, {pipeline_mode = #tpu.pipeline_mode<synchronous>, transform_indices = @transform_3, window_bounds = array<i64: 2, 1>}, {transform_indices = @transform_4, window_bounds = array<i64: 1, 2, 256>}]} {
    %cst = arith.constant 0.000000e+00 : f32
    %0 = vector.broadcast %cst : f32 to vector<20x20x16xf32>
    %c0 = arith.constant 0 : index
    %c0_0 = arith.constant 0 : index
    %c0_1 = arith.constant 0 : index
    %1 = vector.load %arg6[%c0, %c0_0, %c0_1] : memref<20x20x16xf32, #tpu.memory_space<vmem>>, vector<20x20x16xf32>
    tpu.vector_store %arg6[%c0, %c0_0, %c0_1], %0 {strides = array<i32>} : memref<20x20x16xf32, #tpu.memory_space<vmem>>, vector<20x20x16xf32>,
    %c0_2 = arith.constant 0 : index
    %c0_3 = arith.constant 0 : index
    %c0_4 = arith.constant 0 : index
    %c0_5 = arith.constant 0 : index
    %2 = vector.load %arg1[%c0_2, %c0_3, %c0_4, %c0_5] : memref<1x16x16x16xf32, #tpu.memory_space<vmem>>, vector<1x16x16x16xf32>
    %3 = vector.shape_cast %2 : vector<1x16x16x16xf32> to vector<16x16x16xf32>
    %c2 = arith.constant 2 : index
    %c2_6 = arith.constant 2 : index
    %c0_7 = arith.constant 0 : index
    %4 = vector.load %arg6[%c2, %c2_6, %c0_7] : memref<20x20x16xf32, #tpu.memory_space<vmem>>, vector<16x16x16xf32>
    tpu.vector_store %arg6[%c2, %c2_6, %c0_7], %3 {strides = array<i32>} : memref<20x20x16xf32, #tpu.memory_space<vmem>>, vector<16x16x16xf32>,
    %c0_8 = arith.constant 0 : index
    %c0_9 = arith.constant 0 : index
    %c0_10 = arith.constant 0 : index
    %5 = vector.load %arg6[%c0_8, %c0_9, %c0_10] : memref<20x20x16xf32, #tpu.memory_space<vmem>>, vector<20x20x16xf32>
    %6 = vector.extract_strided_slice %5 {offsets = [0, 0, 0], sizes = [16, 16, 16], strides = [1, 1, 1]} : vector<20x20x16xf32> to vector<16x16x16xf32>
    %7 = vector.extract_strided_slice %5 {offsets = [0, 2, 0], sizes = [16, 16, 16], strides = [1, 1, 1]} : vector<20x20x16xf32> to vector<16x16x16xf32>
    %8 = vector.extract_strided_slice %5 {offsets = [0, 4, 0], sizes = [16, 16, 16], strides = [1, 1, 1]} : vector<20x20x16xf32> to vector<16x16x16xf32>
    %9 = vector.extract_strided_slice %5 {offsets = [2, 0, 0], sizes = [16, 16, 16], strides = [1, 1, 1]} : vector<20x20x16xf32> to vector<16x16x16xf32>
    %10 = vector.extract_strided_slice %5 {offsets = [2, 2, 0], sizes = [16, 16, 16], strides = [1, 1, 1]} : vector<20x20x16xf32> to vector<16x16x16xf32>
    %11 = vector.extract_strided_slice %5 {offsets = [2, 4, 0], sizes = [16, 16, 16], strides = [1, 1, 1]} : vector<20x20x16xf32> to vector<16x16x16xf32>
    %12 = vector.extract_strided_slice %5 {offsets = [4, 0, 0], sizes = [16, 16, 16], strides = [1, 1, 1]} : vector<20x20x16xf32> to vector<16x16x16xf32>
    %13 = vector.extract_strided_slice %5 {offsets = [4, 2, 0], sizes = [16, 16, 16], strides = [1, 1, 1]} : vector<20x20x16xf32> to vector<16x16x16xf32>
    %14 = vector.extract_strided_slice %5 {offsets = [4, 4, 0], sizes = [16, 16, 16], strides = [1, 1, 1]} : vector<20x20x16xf32> to vector<16x16x16xf32>
    %15 = tpu.concatenate %6, %7, %8, %9, %10, %11, %12, %13, %14 in 2 : vector<16x16x16xf32>, vector<16x16x16xf32>, vector<16x16x16xf32>, vector<16x16x16xf32>, vector<16x16x16xf32>, vector<16x16x16xf32>, vector<16x16x16xf32>, vector<16x16x16xf32>, vector<16x16x16xf32> -> vector<16x16x144xf32>
    %16 = vector.shape_cast %15 : vector<16x16x144xf32> to vector<256x144xf32>
    %c0_11 = arith.constant 0 : index
    %c0_12 = arith.constant 0 : index
    %17 = vector.load %arg2[%c0_11, %c0_12] : memref<144x32xf32, #tpu.memory_space<vmem>>, vector<144x32xf32>
    %cst_13 = arith.constant dense<0.000000e+00> : vector<256x32xf32>
    %18 = tpu.matmul %16, %17, %cst_13 {dimension_numbers = #tpu.dot_dimension_numbers<[1], [0], [0], [1], [0, 0, 1, 1], [], []>} : vector<256x144xf32>, vector<144x32xf32>, vector<256x32xf32> -> vector<256x32xf32>
    %cst_14 = arith.constant 0.000000e+00 : f32
    %19 = vector.broadcast %cst_14 : f32 to vector<256x32xf32>
    %20 = arith.maximumf %18, %19 : vector<256x32xf32>
    %c0_15 = arith.constant 0 : index
    %c0_16 = arith.constant 0 : index
    %21 = vector.load %arg3[%c0_15, %c0_16] : memref<2x32xf32, #tpu.memory_space<vmem>>, vector<2x32xf32>
    "tpu.trace_start"() <{level = 10 : i32, message = "oc,rc->or"}> : () -> ()
    %cst_17 = arith.constant dense<0.000000e+00> : vector<2x256xf32>
    %22 = tpu.matmul %21, %20, %cst_17 {dimension_numbers = #tpu.dot_dimension_numbers<[1], [1], [0], [0], [0, 0, 1, 0], [], []>} : vector<2x32xf32>, vector<256x32xf32>, vector<2x256xf32> -> vector<2x256xf32>
    "tpu.trace_stop"() : () -> ()
    %c0_18 = arith.constant 0 : index
    %c0_19 = arith.constant 0 : index
    %23 = vector.load %arg4[%c0_18, %c0_19] : memref<2x1xf32, #tpu.memory_space<vmem>>, vector<2x1xf32>
    %24 = vector.broadcast %23 : vector<2x1xf32> to vector<2x256xf32>
    %25 = arith.addf %22, %24 : vector<2x256xf32>
    %c0_20 = arith.constant 0 : index
    %c0_21 = arith.constant 0 : index
    %c0_22 = arith.constant 0 : index
    %26 = vector.load %arg5[%c0_20, %c0_21, %c0_22] : memref<1x2x256xf32, #tpu.memory_space<vmem>>, vector<1x2x256xf32>
    %27 = vector.shape_cast %26 : vector<1x2x256xf32> to vector<2x256xf32>
    %28 = vector.shape_cast %25 : vector<2x256xf32> to vector<1x2x256xf32>
    tpu.vector_store %arg5[%c0_20, %c0_21, %c0_22], %28 {strides = array<i32>} : memref<1x2x256xf32, #tpu.memory_space<vmem>>, vector<1x2x256xf32>,
    return
  }
  func.func @transform_0(%arg0: i32) -> (i32, i32, i32, i32) {
    %c0_i32 = arith.constant 0 : i32
    %c0_i32_0 = arith.constant 0 : i32
    %c0_i32_1 = arith.constant 0 : i32
    %c0_i32_2 = arith.constant 0 : i32
    return %arg0, %c0_i32, %c0_i32_0, %c0_i32_1 : i32, i32, i32, i32
  }
  func.func @transform_1(%arg0: i32) -> (i32, i32) {
    %c0_i32 = arith.constant 0 : i32
    %c0_i32_0 = arith.constant 0 : i32
    %c0_i32_1 = arith.constant 0 : i32
    return %c0_i32, %c0_i32_0 : i32, i32
  }
  func.func @transform_2(%arg0: i32) -> (i32, i32) {
    %c0_i32 = arith.constant 0 : i32
    %c0_i32_0 = arith.constant 0 : i32
    %c0_i32_1 = arith.constant 0 : i32
    return %c0_i32, %c0_i32_0 : i32, i32
  }
  func.func @transform_3(%arg0: i32) -> (i32, i32) {
    %c0_i32 = arith.constant 0 : i32
    %c0_i32_0 = arith.constant 0 : i32
    %c0_i32_1 = arith.constant 0 : i32
    return %c0_i32, %c0_i32_0 : i32, i32
  }
  func.func @transform_4(%arg0: i32) -> (i32, i32, i32) {
    %c0_i32 = arith.constant 0 : i32
    %c0_i32_0 = arith.constant 0 : i32
    %c0_i32_1 = arith.constant 0 : i32
    return %arg0, %c0_i32, %c0_i32_0 : i32, i32, i32
  }
}

</mosaic_0001>

<llo_original>
// kernel: tpu_custom_call.1
$region0: #{tpu_custom_call.1}
  #allocation0 [shape = 'u32[]', space=smem, size = 0x4, offset = 0x4, fixed_abs, tag = 'smem constant byte address 0x4 - core index']
  #allocation1 [shape = 'u32[144,128]{1,0:T(1,128)}', space=vmem, size = 0x12000, scoped, tag = 'internal scratch']
  #allocation2 [shape = 'f32[20,20,16]{2,1,0:T(8,128)}', space=vmem, size = 0x3c000, scoped, tag = 'scratch operand']
  %s0 = inlined_call_operand.hbm [shape: f32[2,16,16,16], index: 0, kind: input, shape index: {}]
  %s1 = inlined_call_operand.vmem [shape: f32[144,32], index: 1, kind: input, shape index: {}]
  %s2 = inlined_call_operand.vmem [shape: f32[2,32], index: 2, kind: input, shape index: {}]
  %s3 = inlined_call_operand.vmem [shape: f32[2,1], index: 3, kind: input, shape index: {}]
  %s4 = inlined_call_operand.hbm [shape: f32[2,2,256], index: 4, kind: output, shape index: {}]
  %s5 = sld [smem:[#allocation0]]
  $region53: #{tpu_custom_call.1} parent=0
    _
  %s7 = ssub.s32 1, %s5
  %s8 = scalar_select 0, %s7, %s5
  $region1: #{tpu_custom_call.1} parent=0
    #allocation3 [shape = 'u8[262144]{0}', space=vmem, size = 0x40000, scoped, tag = 'input window, operand 0']
    #allocation4 [shape = 's32[2]{0}', space=sflag, size = 0x8, scoped, tag = 'scoped memory for tpu_custom_call.1']
    #allocation5 [shape = 's32[2]{0}', space=sflag, size = 0x8, scoped, tag = 'scoped memory for tpu_custom_call.1']
    #allocation6 [shape = 'u8[4096]{0}', space=vmem, size = 0x1000, scoped, tag = 'output window, operand 0']
    %9 = vsyncpa [#allocation4], 0
    %s10 = scalar_lea.sflag [#allocation4], 1
    %11 = vsyncpa %s10, 0
    %12 = vsyncpa [#allocation5], 0
    %s13 = scalar_lea.sflag [#allocation5], 1
    %14 = vsyncpa %s13, 0
    loop: start=0, step=1, limit=4
    $region2: #{tpu_custom_call.1} parent=1 // loop_pre_header
      _
    $region3: #{tpu_custom_call.1} parent=1 // loop_header
      %s16 = sphi 0, %s20
      %p17 = scmp.ge.s32.totalorder %s16, 4
      %s26 = sphi 0, %s28
      %s29 = sphi 0, %s26
      %s30 = sphi 0, %s29
      %s46 = sphi 0, %s30
      %s50 = sphi 0, %s50
      %s52 = sphi 0, %s50
      %s53 = sphi 0, %s52
      %s67 = sphi 0, %s53
      %s71 = sphi 0, %s71
      %s73 = sphi 0, %s71
      %s74 = sphi 0, %s73
      %s88 = sphi 0, %s74
      %s92 = sphi 0, %s92
      %s94 = sphi 0, %s92
      %s95 = sphi 0, %s94
      %s109 = sphi 0, %s95
      %s115 = sphi 0, %s117
      %s118 = sphi 0, %s115
      %s119 = sphi 0, %s118
      %s135 = sphi 0, %s119
    $region4: #{tpu_custom_call.1} parent=1 // loop_header_branch
      %19 = sbr.rel (%p17) target = $region8
    $region5: #{tpu_custom_call.1} parent=1 // loop_body
      %s21 = ssub.s32 %s16, 1
      %s22 = ssub.s32 %s16, 2
      %s23 = sadd.s32 %s16, 1
      %s24 = ssub.s32 %s16, %s23
      %p25 = scmp.eq.s32.totalorder %s24, 0
      %s27 = sadd.s32 %s26, 1
      %s28 = scalar_select %p25, %s26, %s27
      %p31 = pneg %p25
      %p32 = scmp.eq.s32.totalorder %s16, 1
      %p33 = por %p31, %p32
      %p34 = scmp.ne.s32.totalorder %s26, %s29
      %p35 = scmp.eq.s32.totalorder %s16, 0
      %p36 = por %p34, %p35
      %p37 = scmp.ne.s32.totalorder %s26, %s29
      %p38 = scmp.eq.s32.totalorder %s21, 1
      %p39 = por %p37, %p38
      %p40 = scmp.ne.s32.totalorder %s29, %s30
      %p41 = scmp.eq.s32.totalorder %s21, 0
      %p42 = por %p40, %p41
      %p43 = scmp.ne.s32.totalorder %s29, %s30
      %p44 = scmp.eq.s32.totalorder %s22, 1
      %p45 = por %p43, %p44
      %p47 = scmp.ne.s32.totalorder %s30, %s46
      %p48 = scmp.eq.s32.totalorder %s22, 0
      %p49 = por %p47, %p48
      %s51 = sadd.s32 %s50, 1
      %p54 = scmp.eq.s32.totalorder %s16, 1
      %p55 = scmp.ne.s32.totalorder %s50, %s52
      %p56 = scmp.eq.s32.totalorder %s16, 0
      %p57 = por %p55, %p56
      %p58 = scmp.ne.s32.totalorder %s50, %s52
      %p59 = scmp.eq.s32.totalorder %s21, 1
      %p60 = por %p58, %p59
      %p61 = scmp.ne.s32.totalorder %s52, %s53
      %p62 = scmp.eq.s32.totalorder %s21, 0
      %p63 = por %p61, %p62
      %p64 = scmp.ne.s32.totalorder %s52, %s53
      %p65 = scmp.eq.s32.totalorder %s22, 1
      %p66 = por %p64, %p65
      %p68 = scmp.ne.s32.totalorder %s53, %s67
      %p69 = scmp.eq.s32.totalorder %s22, 0
      %p70 = por %p68, %p69
      %s72 = sadd.s32 %s71, 1
      %p75 = scmp.eq.s32.totalorder %s16, 1
      %p76 = scmp.ne.s32.totalorder %s71, %s73
      %p77 = scmp.eq.s32.totalorder %s16, 0
      %p78 = por %p76, %p77
      %p79 = scmp.ne.s32.totalorder %s71, %s73
      %p80 = scmp.eq.s32.totalorder %s21, 1
      %p81 = por %p79, %p80
      %p82 = scmp.ne.s32.totalorder %s73, %s74
      %p83 = scmp.eq.s32.totalorder %s21, 0
      %p84 = por %p82, %p83
      %p85 = scmp.ne.s32.totalorder %s73, %s74
      %p86 = scmp.eq.s32.totalorder %s22, 1
      %p87 = por %p85, %p86
      %p89 = scmp.ne.s32.totalorder %s74, %s88
      %p90 = scmp.eq.s32.totalorder %s22, 0
      %p91 = por %p89, %p90
      %s93 = sadd.s32 %s92, 1
      %p96 = scmp.eq.s32.totalorder %s16, 1
      %p97 = scmp.ne.s32.totalorder %s92, %s94
      %p98 = scmp.eq.s32.totalorder %s16, 0
      %p99 = por %p97, %p98
      %p100 = scmp.ne.s32.totalorder %s92, %s94
      %p101 = scmp.eq.s32.totalorder %s21, 1
      %p102 = por %p100, %p101
      %p103 = scmp.ne.s32.totalorder %s94, %s95
      %p104 = scmp.eq.s32.totalorder %s21, 0
      %p105 = por %p103, %p104
      %p106 = scmp.ne.s32.totalorder %s94, %s95
      %p107 = scmp.eq.s32.totalorder %s22, 1
      %p108 = por %p106, %p107
      %p110 = scmp.ne.s32.totalorder %s95, %s109
      %p111 = scmp.eq.s32.totalorder %s22, 0
      %p112 = por %p110, %p111
      %s113 = ssub.s32 %s16, %s23
      %p114 = scmp.eq.s32.totalorder %s113, 0
      %s116 = sadd.s32 %s115, 1
      %s117 = scalar_select %p114, %s115, %s116
      %p120 = pneg %p114
      %p121 = scmp.eq.s32.totalorder %s16, 1
      %p122 = por %p120, %p121
      %p123 = scmp.ne.s32.totalorder %s115, %s118
      %p124 = scmp.eq.s32.totalorder %s16, 0
      %p125 = por %p123, %p124
      %p126 = scmp.ne.s32.totalorder %s115, %s118
      %p127 = scmp.eq.s32.totalorder %s21, 1
      %p128 = por %p126, %p127
      %p129 = scmp.ne.s32.totalorder %s118, %s119
      %p130 = scmp.eq.s32.totalorder %s21, 0
      %p131 = por %p129, %p130
      %p132 = scmp.ne.s32.totalorder %s118, %s119
      %p133 = scmp.eq.s32.totalorder %s22, 1
      %p134 = por %p132, %p133
      %p136 = scmp.ne.s32.totalorder %s119, %s135
      %p137 = scmp.eq.s32.totalorder %s22, 0
      %p138 = por %p136, %p137
      %p139 = scmp.le.s32.totalorder 1, %s16
      %p140 = scmp.lt.s32.totalorder %s16, 3
      %p141 = pnand %p139, %p140
      %p142 = pneg %p141
      // Predicated region
      $region9: #{tpu_custom_call.1} parent=5 // pred_check
        _
      $region10: #{tpu_custom_call.1} parent=5 // pred_check_branch
        %144 = sbr.rel (%p141) target = $region12
      $region11: #{tpu_custom_call.1} parent=5 // pred_region
        %s145 = ssub.s32 %s16, 1
        // Predicated region
        $region13: #{tpu_custom_call.1} parent=11 // pred_check
          %p146 = pneg %p63
        $region14: #{tpu_custom_call.1} parent=11 // pred_check_branch
          %148 = sbr.rel (%p146) target = $region16
        $region15: #{tpu_custom_call.1} parent=11 // pred_region
          _
        $region16: #{tpu_custom_call.1} parent=11 // pred_fallthru
          _
        // Predicated region
        $region17: #{tpu_custom_call.1} parent=11 // pred_check
          %p149 = pneg %p84
        $region18: #{tpu_custom_call.1} parent=11 // pred_check_branch
          %151 = sbr.rel (%p149) target = $region20
        $region19: #{tpu_custom_call.1} parent=11 // pred_region
          _
        $region20: #{tpu_custom_call.1} parent=11 // pred_fallthru
          _
        // Predicated region
        $region21: #{tpu_custom_call.1} parent=11 // pred_check
          %p152 = pneg %p105
        $region22: #{tpu_custom_call.1} parent=11 // pred_check_branch
          %154 = sbr.rel (%p152) target = $region24
        $region23: #{tpu_custom_call.1} parent=11 // pred_region
          _
        $region24: #{tpu_custom_call.1} parent=11 // pred_fallthru
          _
      $region12: #{tpu_custom_call.1} parent=5 // pred_fallthru
        _
      %p155 = scmp.lt.s32.totalorder %s16, 2
      // Predicated region
      $region25: #{tpu_custom_call.1} parent=5 // pred_check
        %p156 = pneg %p155
      $region26: #{tpu_custom_call.1} parent=5 // pred_check_branch
        %158 = sbr.rel (%p156) target = $region28
      $region27: #{tpu_custom_call.1} parent=5 // pred_region
        // Predicated region
        $region29: #{tpu_custom_call.1} parent=27 // pred_check
          %p159 = pneg %p36
        $region30: #{tpu_custom_call.1} parent=27 // pred_check_branch
          %161 = sbr.rel (%p159) target = $region32
        $region31: #{tpu_custom_call.1} parent=27 // pred_region
          %s162 = sand.u32 %s26, 1
          %s163 = scalar_lea.sflag [#allocation4], %s162
          %s164 = sand.u32 %s26, 1
          %s165 = smul.addr %s164, 256
          %s166 = scalar_lea.vmem [#allocation3], %s165
          %s168 = ssub.s32 4096, 4096
          %169 = vsyncadd %s163, %s168
          %s170 = smul.addr %s16, 32
          %s171 = smul.addr %s170, 128
          %s172 = scalar_lea.hbm %s0, %s171
          %s173 = sshll.u32 %s166, 4
          %s174 = int_to_ptr.vmem [resolvable:$true] %s173
          %179 = dma.hbm_to_vmem [thread:$0]  %s172, 4096, %s174, %s163, 128, 128, 8
        $region32: #{tpu_custom_call.1} parent=27 // pred_fallthru
          _
      $region28: #{tpu_custom_call.1} parent=5 // pred_fallthru
        _
      %p180 = scmp.le.s32.totalorder 1, %s16
      %p181 = scmp.lt.s32.totalorder %s16, 3
      %p182 = pnand %p180, %p181
      %p183 = pneg %p182
      // Predicated region
      $region33: #{tpu_custom_call.1} parent=5 // pred_check
        _
      $region34: #{tpu_custom_call.1} parent=5 // pred_check_branch
        %185 = sbr.rel (%p182) target = $region36
      $region35: #{tpu_custom_call.1} parent=5 // pred_region
        %s186 = ssub.s32 %s16, 1
        %s187 = sand.u32 %s29, 1
        %s188 = scalar_lea.sflag [#allocation4], %s187
        %s189 = sand.u32 %s29, 1
        %s190 = smul.addr %s189, 256
        %s191 = scalar_lea.vmem [#allocation3], %s190
        // Predicated region
        $region37: #{tpu_custom_call.1} parent=35 // pred_check
          %p192 = pneg %p42
        $region38: #{tpu_custom_call.1} parent=35 // pred_check_branch
          %194 = sbr.rel (%p192) target = $region40
        $region39: #{tpu_custom_call.1} parent=35 // pred_region
          %195 = dma.done %s188, 4096
        $region40: #{tpu_custom_call.1} parent=35 // pred_fallthru
          _
        %s196 = sand.u32 %s29, 1
        %s197 = scalar_lea.sflag [#allocation4], %s196
        %s198 = sand.u32 %s29, 1
        %s199 = smul.addr %s198, 256
        %s200 = scalar_lea.vmem [#allocation3], %s199
        %p201 = pneg %p42
        %p202 = pneg %p39
        %p203 = pneg %p63
        %p204 = pneg %p60
        %p205 = pneg %p84
        %p206 = pneg %p81
        %p207 = pneg %p105
        %p208 = pneg %p102
        %p209 = pneg %p131
        %p210 = pneg %p128
        %s211 = sand.u32 %s118, 1
        %s212 = scalar_lea.sflag [#allocation5], %s211
        %s213 = sand.u32 %s118, 1
        %s214 = smul.addr %s213, 4
        %s215 = scalar_lea.vmem [#allocation6], %s214
        %vm216 = vcmask 130048
        %217 = vst.msk [vmem:[#allocation2] sm:$0xff] %vm216, 0.0
        %218 = vst.msk [vmem:[#allocation2 + $0x8] sm:$0xff] %vm216, 0.0
        %vm219 = vcmask 125952
        %220 = vst.msk [vmem:[#allocation2 + $0x10] sm:$0xf] %vm219, 0.0
        %221 = vst.msk [vmem:[#allocation2 + $0x18] sm:$0xff] %vm216, 0.0
        %222 = vst.msk [vmem:[#allocation2 + $0x20] sm:$0xff] %vm216, 0.0
        %223 = vst.msk [vmem:[#allocation2 + $0x28] sm:$0xf] %vm219, 0.0
        %224 = vst.msk [vmem:[#allocation2 + $0x30] sm:$0xff] %vm216, 0.0
        %225 = vst.msk [vmem:[#allocation2 + $0x38] sm:$0xff] %vm216, 0.0
        %226 = vst.msk [vmem:[#allocation2 + $0x40] sm:$0xf] %vm219, 0.0
        %227 = vst.msk [vmem:[#allocation2 + $0x48] sm:$0xff] %vm216, 0.0
        %228 = vst.msk [vmem:[#allocation2 + $0x50] sm:$0xff] %vm216, 0.0
        %229 = vst.msk [vmem:[#allocation2 + $0x58] sm:$0xf] %vm219, 0.0
        %230 = vst.msk [vmem:[#allocation2 + $0x60] sm:$0xff] %vm216, 0.0
        %231 = vst.msk [vmem:[#allocation2 + $0x68] sm:$0xff] %vm216, 0.0
        %232 = vst.msk [vmem:[#allocation2 + $0x70] sm:$0xf] %vm219, 0.0
        %233 = vst.msk [vmem:[#allocation2 + $0x78] sm:$0xff] %vm216, 0.0
        %234 = vst.msk [vmem:[#allocation2 + $0x80] sm:$0xff] %vm216, 0.0
        %235 = vst.msk [vmem:[#allocation2 + $0x88] sm:$0xf] %vm219, 0.0
        %236 = vst.msk [vmem:[#allocation2 + $0x90] sm:$0xff] %vm216, 0.0
        %237 = vst.msk [vmem:[#allocation2 + $0x98] sm:$0xff] %vm216, 0.0
        %238 = vst.msk [vmem:[#allocation2 + $0xa0] sm:$0xf] %vm219, 0.0
        %239 = vst.msk [vmem:[#allocation2 + $0xa8] sm:$0xff] %vm216, 0.0
        %240 = vst.msk [vmem:[#allocation2 + $0xb0] sm:$0xff] %vm216, 0.0
        %241 = vst.msk [vmem:[#allocation2 + $0xb8] sm:$0xf] %vm219, 0.0
        %242 = vst.msk [vmem:[#allocation2 + $0xc0] sm:$0xff] %vm216, 0.0
        %243 = vst.msk [vmem:[#allocation2 + $0xc8] sm:$0xff] %vm216, 0.0
        %244 = vst.msk [vmem:[#allocation2 + $0xd0] sm:$0xf] %vm219, 0.0
        %245 = vst.msk [vmem:[#allocation2 + $0xd8] sm:$0xff] %vm216, 0.0
        %246 = vst.msk [vmem:[#allocation2 + $0xe0] sm:$0xff] %vm216, 0.0
        %247 = vst.msk [vmem:[#allocation2 + $0xe8] sm:$0xf] %vm219, 0.0
        %248 = vst.msk [vmem:[#allocation2 + $0xf0] sm:$0xff] %vm216, 0.0
        %249 = vst.msk [vmem:[#allocation2 + $0xf8] sm:$0xff] %vm216, 0.0
        %250 = vst.msk [vmem:[#allocation2 + $0x100] sm:$0xf] %vm219, 0.0
        %251 = vst.msk [vmem:[#allocation2 + $0x108] sm:$0xff] %vm216, 0.0
        %252 = vst.msk [vmem:[#allocation2 + $0x110] sm:$0xff] %vm216, 0.0
        %253 = vst.msk [vmem:[#allocation2 + $0x118] sm:$0xf] %vm219, 0.0
        %254 = vst.msk [vmem:[#allocation2 + $0x120] sm:$0xff] %vm216, 0.0
        %255 = vst.msk [vmem:[#allocation2 + $0x128] sm:$0xff] %vm216, 0.0
        %256 = vst.msk [vmem:[#allocation2 + $0x130] sm:$0xf] %vm219, 0.0
        %257 = vst.msk [vmem:[#allocation2 + $0x138] sm:$0xff] %vm216, 0.0
        %258 = vst.msk [vmem:[#allocation2 + $0x140] sm:$0xff] %vm216, 0.0
        %259 = vst.msk [vmem:[#allocation2 + $0x148] sm:$0xf] %vm219, 0.0
        %260 = vst.msk [vmem:[#allocation2 + $0x150] sm:$0xff] %vm216, 0.0
        %261 = vst.msk [vmem:[#allocation2 + $0x158] sm:$0xff] %vm216, 0.0
        %262 = vst.msk [vmem:[#allocation2 + $0x160] sm:$0xf] %vm219, 0.0
        %263 = vst.msk [vmem:[#allocation2 + $0x168] sm:$0xff] %vm216, 0.0
        %264 = vst.msk [vmem:[#allocation2 + $0x170] sm:$0xff] %vm216, 0.0
        %265 = vst.msk [vmem:[#allocation2 + $0x178] sm:$0xf] %vm219, 0.0
        %266 = vst.msk [vmem:[#allocation2 + $0x180] sm:$0xff] %vm216, 0.0
        %267 = vst.msk [vmem:[#allocation2 + $0x188] sm:$0xff] %vm216, 0.0
        %268 = vst.msk [vmem:[#allocation2 + $0x190] sm:$0xf] %vm219, 0.0
        %269 = vst.msk [vmem:[#allocation2 + $0x198] sm:$0xff] %vm216, 0.0
        %270 = vst.msk [vmem:[#allocation2 + $0x1a0] sm:$0xff] %vm216, 0.0
        %271 = vst.msk [vmem:[#allocation2 + $0x1a8] sm:$0xf] %vm219, 0.0
        %272 = vst.msk [vmem:[#allocation2 + $0x1b0] sm:$0xff] %vm216, 0.0
        %273 = vst.msk [vmem:[#allocation2 + $0x1b8] sm:$0xff] %vm216, 0.0
        %274 = vst.msk [vmem:[#allocation2 + $0x1c0] sm:$0xf] %vm219, 0.0
        %275 = vst.msk [vmem:[#allocation2 + $0x1c8] sm:$0xff] %vm216, 0.0
        %276 = vst.msk [vmem:[#allocation2 + $0x1d0] sm:$0xff] %vm216, 0.0
        %277 = vst.msk [vmem:[#allocation2 + $0x1d8] sm:$0xf] %vm219, 0.0
        %v278 = vld [vmem:[%s191] sm:$0xff]
        %v279 = vld [vmem:[%s191 + $0x8] sm:$0xff]
        %v280 = vld [vmem:[%s191 + $0x10] sm:$0xff]
        %v281 = vld [vmem:[%s191 + $0x18] sm:$0xff]
        %v282 = vld [vmem:[%s191 + $0x20] sm:$0xff]
        %v283 = vld [vmem:[%s191 + $0x28] sm:$0xff]
        %v284 = vld [vmem:[%s191 + $0x30] sm:$0xff]
        %v285 = vld [vmem:[%s191 + $0x38] sm:$0xff]
        %v286 = vld [vmem:[%s191 + $0x40] sm:$0xff]
        %v287 = vld [vmem:[%s191 + $0x48] sm:$0xff]
        %v288 = vld [vmem:[%s191 + $0x50] sm:$0xff]
        %v289 = vld [vmem:[%s191 + $0x58] sm:$0xff]
        %v290 = vld [vmem:[%s191 + $0x60] sm:$0xff]
        %v291 = vld [vmem:[%s191 + $0x68] sm:$0xff]
        %v292 = vld [vmem:[%s191 + $0x70] sm:$0xff]
        %v293 = vld [vmem:[%s191 + $0x78] sm:$0xff]
        %v294 = vld [vmem:[%s191 + $0x80] sm:$0xff]
        %v295 = vld [vmem:[%s191 + $0x88] sm:$0xff]
        %v296 = vld [vmem:[%s191 + $0x90] sm:$0xff]
        %v297 = vld [vmem:[%s191 + $0x98] sm:$0xff]
        %v298 = vld [vmem:[%s191 + $0xa0] sm:$0xff]
        %v299 = vld [vmem:[%s191 + $0xa8] sm:$0xff]
        %v300 = vld [vmem:[%s191 + $0xb0] sm:$0xff]
        %v301 = vld [vmem:[%s191 + $0xb8] sm:$0xff]
        %v302 = vld [vmem:[%s191 + $0xc0] sm:$0xff]
        %v303 = vld [vmem:[%s191 + $0xc8] sm:$0xff]
        %v304 = vld [vmem:[%s191 + $0xd0] sm:$0xff]
        %v305 = vld [vmem:[%s191 + $0xd8] sm:$0xff]
        %v306 = vld [vmem:[%s191 + $0xe0] sm:$0xff]
        %v307 = vld [vmem:[%s191 + $0xe8] sm:$0xff]
        %v308 = vld [vmem:[%s191 + $0xf0] sm:$0xff]
        %v309 = vld [vmem:[%s191 + $0xf8] sm:$0xff]
        %s310 = scalar_lea.vmem [#allocation2], 48
        %311 = vst.msk [vmem:[%s310 + $0x2] sm:$0xff] %vm216, %v278
        %312 = vst.msk [vmem:[%s310 + $0xa] sm:$0xff] %vm216, %v279
        %313 = vst.msk [vmem:[%s310 + $0x1a] sm:$0xff] %vm216, %v280
        %314 = vst.msk [vmem:[%s310 + $0x22] sm:$0xff] %vm216, %v281
        %315 = vst.msk [vmem:[%s310 + $0x32] sm:$0xff] %vm216, %v282
        %316 = vst.msk [vmem:[%s310 + $0x3a] sm:$0xff] %vm216, %v283
        %317 = vst.msk [vmem:[%s310 + $0x4a] sm:$0xff] %vm216, %v284
        %318 = vst.msk [vmem:[%s310 + $0x52] sm:$0xff] %vm216, %v285
        %319 = vst.msk [vmem:[%s310 + $0x62] sm:$0xff] %vm216, %v286
        %320 = vst.msk [vmem:[%s310 + $0x6a] sm:$0xff] %vm216, %v287
        %321 = vst.msk [vmem:[%s310 + $0x7a] sm:$0xff] %vm216, %v288
        %322 = vst.msk [vmem:[%s310 + $0x82] sm:$0xff] %vm216, %v289
        %323 = vst.msk [vmem:[%s310 + $0x92] sm:$0xff] %vm216, %v290
        %324 = vst.msk [vmem:[%s310 + $0x9a] sm:$0xff] %vm216, %v291
        %325 = vst.msk [vmem:[%s310 + $0xaa] sm:$0xff] %vm216, %v292
        %326 = vst.msk [vmem:[%s310 + $0xb2] sm:$0xff] %vm216, %v293
        %327 = vst.msk [vmem:[%s310 + $0xc2] sm:$0xff] %vm216, %v294
        %328 = vst.msk [vmem:[%s310 + $0xca] sm:$0xff] %vm216, %v295
        %329 = vst.msk [vmem:[%s310 + $0xda] sm:$0xff] %vm216, %v296
        %330 = vst.msk [vmem:[%s310 + $0xe2] sm:$0xff] %vm216, %v297
        %331 = vst.msk [vmem:[%s310 + $0xf2] sm:$0xff] %vm216, %v298
        %332 = vst.msk [vmem:[%s310 + $0xfa] sm:$0xff] %vm216, %v299
        %333 = vst.msk [vmem:[%s310 + $0x10a] sm:$0xff] %vm216, %v300
        %334 = vst.msk [vmem:[%s310 + $0x112] sm:$0xff] %vm216, %v301
        %335 = vst.msk [vmem:[%s310 + $0x122] sm:$0xff] %vm216, %v302
        %336 = vst.msk [vmem:[%s310 + $0x12a] sm:$0xff] %vm216, %v303
        %337 = vst.msk [vmem:[%s310 + $0x13a] sm:$0xff] %vm216, %v304
        %338 = vst.msk [vmem:[%s310 + $0x142] sm:$0xff] %vm216, %v305
        %339 = vst.msk [vmem:[%s310 + $0x152] sm:$0xff] %vm216, %v306
        %340 = vst.msk [vmem:[%s310 + $0x15a] sm:$0xff] %vm216, %v307
        %341 = vst.msk [vmem:[%s310 + $0x16a] sm:$0xff] %vm216, %v308
        %342 = vst.msk [vmem:[%s310 + $0x172] sm:$0xff] %vm216, %v309
        %v343 = vld [vmem:[#allocation2] sm:$0xff]
        %v344 = vld [vmem:[#allocation2 + $0x8] sm:$0xff]
        %v345 = vld [vmem:[#allocation2 + $0x10] sm:$0xf]
        %v346 = vld [vmem:[#allocation2 + $0x18] sm:$0xff]
        %v347 = vld [vmem:[#allocation2 + $0x20] sm:$0xff]
        %v348 = vld [vmem:[#allocation2 + $0x28] sm:$0xf]
        %v349 = vld [vmem:[#allocation2 + $0x30] sm:$0xff]
        %v350 = vld [vmem:[#allocation2 + $0x38] sm:$0xff]
        %v351 = vld [vmem:[#allocation2 + $0x40] sm:$0xf]
        %v352 = vld [vmem:[#allocation2 + $0x48] sm:$0xff]
        %v353 = vld [vmem:[#allocation2 + $0x50] sm:$0xff]
        %v354 = vld [vmem:[#allocation2 + $0x58] sm:$0xf]
        %v355 = vld [vmem:[#allocation2 + $0x60] sm:$0xff]
        %v356 = vld [vmem:[#allocation2 + $0x68] sm:$0xff]
        %v357 = vld [vmem:[#allocation2 + $0x70] sm:$0xf]
        %v358 = vld [vmem:[#allocation2 + $0x78] sm:$0xff]
        %v359 = vld [vmem:[#allocation2 + $0x80] sm:$0xff]
        %v360 = vld [vmem:[#allocation2 + $0x88] sm:$0xf]
        %v361 = vld [vmem:[#allocation2 + $0x90] sm:$0xff]
        %v362 = vld [vmem:[#allocation2 + $0x98] sm:$0xff]
        %v363 = vld [vmem:[#allocation2 + $0xa0] sm:$0xf]
        %v364 = vld [vmem:[#allocation2 + $0xa8] sm:$0xff]
        %v365 = vld [vmem:[#allocation2 + $0xb0] sm:$0xff]
        %v366 = vld [vmem:[#allocation2 + $0xb8] sm:$0xf]
        %v367 = vld [vmem:[#allocation2 + $0xc0] sm:$0xff]
        %v368 = vld [vmem:[#allocation2 + $0xc8] sm:$0xff]
        %v369 = vld [vmem:[#allocation2 + $0xd0] sm:$0xf]
        %v370 = vld [vmem:[#allocation2 + $0xd8] sm:$0xff]
        %v371 = vld [vmem:[#allocation2 + $0xe0] sm:$0xff]
        %v372 = vld [vmem:[#allocation2 + $0xe8] sm:$0xf]
        %v373 = vld [vmem:[#allocation2 + $0xf0] sm:$0xff]
        %v374 = vld [vmem:[#allocation2 + $0xf8] sm:$0xff]
        %v375 = vld [vmem:[#allocation2 + $0x100] sm:$0xf]
        %v376 = vld [vmem:[#allocation2 + $0x108] sm:$0xff]
        %v377 = vld [vmem:[#allocation2 + $0x110] sm:$0xff]
        %v378 = vld [vmem:[#allocation2 + $0x118] sm:$0xf]
        %v379 = vld [vmem:[#allocation2 + $0x120] sm:$0xff]
        %v380 = vld [vmem:[#allocation2 + $0x128] sm:$0xff]
        %v381 = vld [vmem:[#allocation2 + $0x130] sm:$0xf]
        %v382 = vld [vmem:[#allocation2 + $0x138] sm:$0xff]
        %v383 = vld [vmem:[#allocation2 + $0x140] sm:$0xff]
        %v384 = vld [vmem:[#allocation2 + $0x148] sm:$0xf]
        %v385 = vld [vmem:[#allocation2 + $0x150] sm:$0xff]
        %v386 = vld [vmem:[#allocation2 + $0x158] sm:$0xff]
        %v387 = vld [vmem:[#allocation2 + $0x160] sm:$0xf]
        %v388 = vld [vmem:[#allocation2 + $0x168] sm:$0xff]
        %v389 = vld [vmem:[#allocation2 + $0x170] sm:$0xff]
        %v390 = vld [vmem:[#allocation2 + $0x178] sm:$0xf]
        %v391 = vld [vmem:[#allocation2 + $0x180] sm:$0xff]
        %v392 = vld [vmem:[#allocation2 + $0x188] sm:$0xff]
        %v393 = vld [vmem:[#allocation2 + $0x190] sm:$0xf]
        %v394 = vld [vmem:[#allocation2 + $0x198] sm:$0xff]
        %v395 = vld [vmem:[#allocation2 + $0x1a0] sm:$0xff]
        %v396 = vld [vmem:[#allocation2 + $0x1a8] sm:$0xf]
        %v397 = vld [vmem:[#allocation2 + $0x1b0] sm:$0xff]
        %v398 = vld [vmem:[#allocation2 + $0x1b8] sm:$0xff]
        %v399 = vld [vmem:[#allocation2 + $0x1c0] sm:$0xf]
        %v400 = vld [vmem:[#allocation2 + $0x1c8] sm:$0xff]
        %v401 = vld [vmem:[#allocation2 + $0x1d0] sm:$0xff]
        %v402 = vld [vmem:[#allocation2 + $0x1d8] sm:$0xf]
        %vm451 = vcmask 1045504
        %v452 = vrot.slane %v343, 2
        %v453 = vrot.slane %v344, 2
        %v454 = vsel %vm451, %v452, %v453
        %v455 = vrot.slane %v345, 2
        %v456 = vsel %vm451, %v453, %v455
        %v457 = vrot.slane %v346, 2
        %v458 = vrot.slane %v347, 2
        %v459 = vsel %vm451, %v457, %v458
        %v460 = vrot.slane %v348, 2
        %v461 = vsel %vm451, %v458, %v460
        %v462 = vrot.slane %v349, 2
        %v463 = vrot.slane %v350, 2
        %v464 = vsel %vm451, %v462, %v463
        %v465 = vrot.slane %v351, 2
        %v466 = vsel %vm451, %v463, %v465
        %v467 = vrot.slane %v352, 2
        %v468 = vrot.slane %v353, 2
        %v469 = vsel %vm451, %v467, %v468
        %v470 = vrot.slane %v354, 2
        %v471 = vsel %vm451, %v468, %v470
        %v472 = vrot.slane %v355, 2
        %v473 = vrot.slane %v356, 2
        %v474 = vsel %vm451, %v472, %v473
        %v475 = vrot.slane %v357, 2
        %v476 = vsel %vm451, %v473, %v475
        %v477 = vrot.slane %v358, 2
        %v478 = vrot.slane %v359, 2
        %v479 = vsel %vm451, %v477, %v478
        %v480 = vrot.slane %v360, 2
        %v481 = vsel %vm451, %v478, %v480
        %v482 = vrot.slane %v361, 2
        %v483 = vrot.slane %v362, 2
        %v484 = vsel %vm451, %v482, %v483
        %v485 = vrot.slane %v363, 2
        %v486 = vsel %vm451, %v483, %v485
        %v487 = vrot.slane %v364, 2
        %v488 = vrot.slane %v365, 2
        %v489 = vsel %vm451, %v487, %v488
        %v490 = vrot.slane %v366, 2
        %v491 = vsel %vm451, %v488, %v490
        %v492 = vrot.slane %v367, 2
        %v493 = vrot.slane %v368, 2
        %v494 = vsel %vm451, %v492, %v493
        %v495 = vrot.slane %v369, 2
        %v496 = vsel %vm451, %v493, %v495
        %v497 = vrot.slane %v370, 2
        %v498 = vrot.slane %v371, 2
        %v499 = vsel %vm451, %v497, %v498
        %v500 = vrot.slane %v372, 2
        %v501 = vsel %vm451, %v498, %v500
        %v502 = vrot.slane %v373, 2
        %v503 = vrot.slane %v374, 2
        %v504 = vsel %vm451, %v502, %v503
        %v505 = vrot.slane %v375, 2
        %v506 = vsel %vm451, %v503, %v505
        %v507 = vrot.slane %v376, 2
        %v508 = vrot.slane %v377, 2
        %v509 = vsel %vm451, %v507, %v508
        %v510 = vrot.slane %v378, 2
        %v511 = vsel %vm451, %v508, %v510
        %v512 = vrot.slane %v379, 2
        %v513 = vrot.slane %v380, 2
        %v514 = vsel %vm451, %v512, %v513
        %v515 = vrot.slane %v381, 2
        %v516 = vsel %vm451, %v513, %v515
        %v517 = vrot.slane %v382, 2
        %v518 = vrot.slane %v383, 2
        %v519 = vsel %vm451, %v517, %v518
        %v520 = vrot.slane %v384, 2
        %v521 = vsel %vm451, %v518, %v520
        %v522 = vrot.slane %v385, 2
        %v523 = vrot.slane %v386, 2
        %v524 = vsel %vm451, %v522, %v523
        %v525 = vrot.slane %v387, 2
        %v526 = vsel %vm451, %v523, %v525
        %v527 = vrot.slane %v388, 2
        %v528 = vrot.slane %v389, 2
        %v529 = vsel %vm451, %v527, %v528
        %v530 = vrot.slane %v390, 2
        %v531 = vsel %vm451, %v528, %v530
        %532 = vrot.lane.b32.xlu0 %v454, 16
        %v533 = vpop.permute.xlu0 %532
        %534 = vrot.lane.b32.xlu0 %v456, 16
        %v535 = vpop.permute.xlu0 %534
        %536 = vrot.lane.b32.xlu0 %v459, 16
        %v537 = vpop.permute.xlu0 %536
        %538 = vrot.lane.b32.xlu0 %v461, 16
        %v539 = vpop.permute.xlu0 %538
        %540 = vrot.lane.b32.xlu0 %v464, 16
        %v541 = vpop.permute.xlu0 %540
        %542 = vrot.lane.b32.xlu0 %v466, 16
        %v543 = vpop.permute.xlu0 %542
        %544 = vrot.lane.b32.xlu0 %v469, 16
        %v545 = vpop.permute.xlu0 %544
        %546 = vrot.lane.b32.xlu0 %v471, 16
        %v547 = vpop.permute.xlu0 %546
        %548 = vrot.lane.b32.xlu0 %v474, 16
        %v549 = vpop.permute.xlu0 %548
        %550 = vrot.lane.b32.xlu0 %v476, 16
        %v551 = vpop.permute.xlu0 %550
        %552 = vrot.lane.b32.xlu0 %v479, 16
        %v553 = vpop.permute.xlu0 %552
        %554 = vrot.lane.b32.xlu0 %v481, 16
        %v555 = vpop.permute.xlu0 %554
        %556 = vrot.lane.b32.xlu0 %v484, 16
        %v557 = vpop.permute.xlu0 %556
        %558 = vrot.lane.b32.xlu0 %v486, 16
        %v559 = vpop.permute.xlu0 %558
        %560 = vrot.lane.b32.xlu0 %v489, 16
        %v561 = vpop.permute.xlu0 %560
        %562 = vrot.lane.b32.xlu0 %v491, 16
        %v563 = vpop.permute.xlu0 %562
        %564 = vrot.lane.b32.xlu0 %v494, 16
        %v565 = vpop.permute.xlu0 %564
        %566 = vrot.lane.b32.xlu0 %v496, 16
        %v567 = vpop.permute.xlu0 %566
        %568 = vrot.lane.b32.xlu0 %v499, 16
        %v569 = vpop.permute.xlu0 %568
        %570 = vrot.lane.b32.xlu0 %v501, 16
        %v571 = vpop.permute.xlu0 %570
        %572 = vrot.lane.b32.xlu0 %v504, 16
        %v573 = vpop.permute.xlu0 %572
        %574 = vrot.lane.b32.xlu0 %v506, 16
        %v575 = vpop.permute.xlu0 %574
        %576 = vrot.lane.b32.xlu0 %v509, 16
        %v577 = vpop.permute.xlu0 %576
        %578 = vrot.lane.b32.xlu0 %v511, 16
        %v579 = vpop.permute.xlu0 %578
        %580 = vrot.lane.b32.xlu0 %v514, 16
        %v581 = vpop.permute.xlu0 %580
        %582 = vrot.lane.b32.xlu0 %v516, 16
        %v583 = vpop.permute.xlu0 %582
        %584 = vrot.lane.b32.xlu0 %v519, 16
        %v585 = vpop.permute.xlu0 %584
        %586 = vrot.lane.b32.xlu0 %v521, 16
        %v587 = vpop.permute.xlu0 %586
        %588 = vrot.lane.b32.xlu0 %v524, 16
        %v589 = vpop.permute.xlu0 %588
        %590 = vrot.lane.b32.xlu0 %v526, 16
        %v591 = vpop.permute.xlu0 %590
        %592 = vrot.lane.b32.xlu0 %v529, 16
        %v593 = vpop.permute.xlu0 %592
        %594 = vrot.lane.b32.xlu0 %v531, 16
        %v595 = vpop.permute.xlu0 %594
        %vm628 = vcmask 1043456
        %v629 = vrot.slane %v343, 4
        %v630 = vrot.slane %v344, 4
        %v631 = vsel %vm628, %v629, %v630
        %v632 = vrot.slane %v345, 4
        %v633 = vsel %vm628, %v630, %v632
        %v634 = vrot.slane %v346, 4
        %v635 = vrot.slane %v347, 4
        %v636 = vsel %vm628, %v634, %v635
        %v637 = vrot.slane %v348, 4
        %v638 = vsel %vm628, %v635, %v637
        %v639 = vrot.slane %v349, 4
        %v640 = vrot.slane %v350, 4
        %v641 = vsel %vm628, %v639, %v640
        %v642 = vrot.slane %v351, 4
        %v643 = vsel %vm628, %v640, %v642
        %v644 = vrot.slane %v352, 4
        %v645 = vrot.slane %v353, 4
        %v646 = vsel %vm628, %v644, %v645
        %v647 = vrot.slane %v354, 4
        %v648 = vsel %vm628, %v645, %v647
        %v649 = vrot.slane %v355, 4
        %v650 = vrot.slane %v356, 4
        %v651 = vsel %vm628, %v649, %v650
        %v652 = vrot.slane %v357, 4
        %v653 = vsel %vm628, %v650, %v652
        %v654 = vrot.slane %v358, 4
        %v655 = vrot.slane %v359, 4
        %v656 = vsel %vm628, %v654, %v655
        %v657 = vrot.slane %v360, 4
        %v658 = vsel %vm628, %v655, %v657
        %v659 = vrot.slane %v361, 4
        %v660 = vrot.slane %v362, 4
        %v661 = vsel %vm628, %v659, %v660
        %v662 = vrot.slane %v363, 4
        %v663 = vsel %vm628, %v660, %v662
        %v664 = vrot.slane %v364, 4
        %v665 = vrot.slane %v365, 4
        %v666 = vsel %vm628, %v664, %v665
        %v667 = vrot.slane %v366, 4
        %v668 = vsel %vm628, %v665, %v667
        %v669 = vrot.slane %v367, 4
        %v670 = vrot.slane %v368, 4
        %v671 = vsel %vm628, %v669, %v670
        %v672 = vrot.slane %v369, 4
        %v673 = vsel %vm628, %v670, %v672
        %v674 = vrot.slane %v370, 4
        %v675 = vrot.slane %v371, 4
        %v676 = vsel %vm628, %v674, %v675
        %v677 = vrot.slane %v372, 4
        %v678 = vsel %vm628, %v675, %v677
        %v679 = vrot.slane %v373, 4
        %v680 = vrot.slane %v374, 4
        %v681 = vsel %vm628, %v679, %v680
        %v682 = vrot.slane %v375, 4
        %v683 = vsel %vm628, %v680, %v682
        %v684 = vrot.slane %v376, 4
        %v685 = vrot.slane %v377, 4
        %v686 = vsel %vm628, %v684, %v685
        %v687 = vrot.slane %v378, 4
        %v688 = vsel %vm628, %v685, %v687
        %v689 = vrot.slane %v379, 4
        %v690 = vrot.slane %v380, 4
        %v691 = vsel %vm628, %v689, %v690
        %v692 = vrot.slane %v381, 4
        %v693 = vsel %vm628, %v690, %v692
        %v694 = vrot.slane %v382, 4
        %v695 = vrot.slane %v383, 4
        %v696 = vsel %vm628, %v694, %v695
        %v697 = vrot.slane %v384, 4
        %v698 = vsel %vm628, %v695, %v697
        %v699 = vrot.slane %v385, 4
        %v700 = vrot.slane %v386, 4
        %v701 = vsel %vm628, %v699, %v700
        %v702 = vrot.slane %v387, 4
        %v703 = vsel %vm628, %v700, %v702
        %v704 = vrot.slane %v388, 4
        %v705 = vrot.slane %v389, 4
        %v706 = vsel %vm628, %v704, %v705
        %v707 = vrot.slane %v390, 4
        %v708 = vsel %vm628, %v705, %v707
        %709 = vrot.lane.b32.xlu0 %v631, 32
        %v710 = vpop.permute.xlu0 %709
        %711 = vrot.lane.b32.xlu0 %v633, 32
        %v712 = vpop.permute.xlu0 %711
        %713 = vrot.lane.b32.xlu0 %v636, 32
        %v714 = vpop.permute.xlu0 %713
        %715 = vrot.lane.b32.xlu0 %v638, 32
        %v716 = vpop.permute.xlu0 %715
        %717 = vrot.lane.b32.xlu0 %v641, 32
        %v718 = vpop.permute.xlu0 %717
        %719 = vrot.lane.b32.xlu0 %v643, 32
        %v720 = vpop.permute.xlu0 %719
        %721 = vrot.lane.b32.xlu0 %v646, 32
        %v722 = vpop.permute.xlu0 %721
        %723 = vrot.lane.b32.xlu0 %v648, 32
        %v724 = vpop.permute.xlu0 %723
        %725 = vrot.lane.b32.xlu0 %v651, 32
        %v726 = vpop.permute.xlu0 %725
        %727 = vrot.lane.b32.xlu0 %v653, 32
        %v728 = vpop.permute.xlu0 %727
        %729 = vrot.lane.b32.xlu0 %v656, 32
        %v730 = vpop.permute.xlu0 %729
        %731 = vrot.lane.b32.xlu0 %v658, 32
        %v732 = vpop.permute.xlu0 %731
        %733 = vrot.lane.b32.xlu0 %v661, 32
        %v734 = vpop.permute.xlu0 %733
        %735 = vrot.lane.b32.xlu0 %v663, 32
        %v736 = vpop.permute.xlu0 %735
        %737 = vrot.lane.b32.xlu0 %v666, 32
        %v738 = vpop.permute.xlu0 %737
        %739 = vrot.lane.b32.xlu0 %v668, 32
        %v740 = vpop.permute.xlu0 %739
        %741 = vrot.lane.b32.xlu0 %v671, 32
        %v742 = vpop.permute.xlu0 %741
        %743 = vrot.lane.b32.xlu0 %v673, 32
        %v744 = vpop.permute.xlu0 %743
        %745 = vrot.lane.b32.xlu0 %v676, 32
        %v746 = vpop.permute.xlu0 %745
        %747 = vrot.lane.b32.xlu0 %v678, 32
        %v748 = vpop.permute.xlu0 %747
        %749 = vrot.lane.b32.xlu0 %v681, 32
        %v750 = vpop.permute.xlu0 %749
        %751 = vrot.lane.b32.xlu0 %v683, 32
        %v752 = vpop.permute.xlu0 %751
        %753 = vrot.lane.b32.xlu0 %v686, 32
        %v754 = vpop.permute.xlu0 %753
        %755 = vrot.lane.b32.xlu0 %v688, 32
        %v756 = vpop.permute.xlu0 %755
        %757 = vrot.lane.b32.xlu0 %v691, 32
        %v758 = vpop.permute.xlu0 %757
        %759 = vrot.lane.b32.xlu0 %v693, 32
        %v760 = vpop.permute.xlu0 %759
        %761 = vrot.lane.b32.xlu0 %v696, 32
        %v762 = vpop.permute.xlu0 %761
        %763 = vrot.lane.b32.xlu0 %v698, 32
        %v764 = vpop.permute.xlu0 %763
        %765 = vrot.lane.b32.xlu0 %v701, 32
        %v766 = vpop.permute.xlu0 %765
        %767 = vrot.lane.b32.xlu0 %v703, 32
        %v768 = vpop.permute.xlu0 %767
        %769 = vrot.lane.b32.xlu0 %v706, 32
        %v770 = vpop.permute.xlu0 %769
        %771 = vrot.lane.b32.xlu0 %v708, 32
        %v772 = vpop.permute.xlu0 %771
        %809 = vrot.lane.b32.xlu0 %v349, 48
        %v810 = vpop.permute.xlu0 %809
        %811 = vrot.lane.b32.xlu0 %v350, 48
        %v812 = vpop.permute.xlu0 %811
        %813 = vrot.lane.b32.xlu0 %v352, 48
        %v814 = vpop.permute.xlu0 %813
        %815 = vrot.lane.b32.xlu0 %v353, 48
        %v816 = vpop.permute.xlu0 %815
        %817 = vrot.lane.b32.xlu0 %v355, 48
        %v818 = vpop.permute.xlu0 %817
        %819 = vrot.lane.b32.xlu0 %v356, 48
        %v820 = vpop.permute.xlu0 %819
        %821 = vrot.lane.b32.xlu0 %v358, 48
        %v822 = vpop.permute.xlu0 %821
        %823 = vrot.lane.b32.xlu0 %v359, 48
        %v824 = vpop.permute.xlu0 %823
        %825 = vrot.lane.b32.xlu0 %v361, 48
        %v826 = vpop.permute.xlu0 %825
        %827 = vrot.lane.b32.xlu0 %v362, 48
        %v828 = vpop.permute.xlu0 %827
        %829 = vrot.lane.b32.xlu0 %v364, 48
        %v830 = vpop.permute.xlu0 %829
        %831 = vrot.lane.b32.xlu0 %v365, 48
        %v832 = vpop.permute.xlu0 %831
        %833 = vrot.lane.b32.xlu0 %v367, 48
        %v834 = vpop.permute.xlu0 %833
        %835 = vrot.lane.b32.xlu0 %v368, 48
        %v836 = vpop.permute.xlu0 %835
        %837 = vrot.lane.b32.xlu0 %v370, 48
        %v838 = vpop.permute.xlu0 %837
        %839 = vrot.lane.b32.xlu0 %v371, 48
        %v840 = vpop.permute.xlu0 %839
        %841 = vrot.lane.b32.xlu0 %v373, 48
        %v842 = vpop.permute.xlu0 %841
        %843 = vrot.lane.b32.xlu0 %v374, 48
        %v844 = vpop.permute.xlu0 %843
        %845 = vrot.lane.b32.xlu0 %v376, 48
        %v846 = vpop.permute.xlu0 %845
        %847 = vrot.lane.b32.xlu0 %v377, 48
        %v848 = vpop.permute.xlu0 %847
        %849 = vrot.lane.b32.xlu0 %v379, 48
        %v850 = vpop.permute.xlu0 %849
        %851 = vrot.lane.b32.xlu0 %v380, 48
        %v852 = vpop.permute.xlu0 %851
        %853 = vrot.lane.b32.xlu0 %v382, 48
        %v854 = vpop.permute.xlu0 %853
        %855 = vrot.lane.b32.xlu0 %v383, 48
        %v856 = vpop.permute.xlu0 %855
        %857 = vrot.lane.b32.xlu0 %v385, 48
        %v858 = vpop.permute.xlu0 %857
        %859 = vrot.lane.b32.xlu0 %v386, 48
        %v860 = vpop.permute.xlu0 %859
        %861 = vrot.lane.b32.xlu0 %v388, 48
        %v862 = vpop.permute.xlu0 %861
        %863 = vrot.lane.b32.xlu0 %v389, 48
        %v864 = vpop.permute.xlu0 %863
        %865 = vrot.lane.b32.xlu0 %v391, 48
        %v866 = vpop.permute.xlu0 %865
        %867 = vrot.lane.b32.xlu0 %v392, 48
        %v868 = vpop.permute.xlu0 %867
        %869 = vrot.lane.b32.xlu0 %v394, 48
        %v870 = vpop.permute.xlu0 %869
        %871 = vrot.lane.b32.xlu0 %v395, 48
        %v872 = vpop.permute.xlu0 %871
        %v907 = vrot.slane %v391, 2
        %v908 = vrot.slane %v392, 2
        %v909 = vsel %vm451, %v907, %v908
        %v910 = vrot.slane %v393, 2
        %v911 = vsel %vm451, %v908, %v910
        %v912 = vrot.slane %v394, 2
        %v913 = vrot.slane %v395, 2
        %v914 = vsel %vm451, %v912, %v913
        %v915 = vrot.slane %v396, 2
        %v916 = vsel %vm451, %v913, %v915
        %917 = vrot.lane.b32.xlu0 %v464, 64
        %v918 = vpop.permute.xlu0 %917
        %919 = vrot.lane.b32.xlu0 %v466, 64
        %v920 = vpop.permute.xlu0 %919
        %921 = vrot.lane.b32.xlu0 %v469, 64
        %v922 = vpop.permute.xlu0 %921
        %923 = vrot.lane.b32.xlu0 %v471, 64
        %v924 = vpop.permute.xlu0 %923
        %925 = vrot.lane.b32.xlu0 %v474, 64
        %v926 = vpop.permute.xlu0 %925
        %927 = vrot.lane.b32.xlu0 %v476, 64
        %v928 = vpop.permute.xlu0 %927
        %929 = vrot.lane.b32.xlu0 %v479, 64
        %v930 = vpop.permute.xlu0 %929
        %931 = vrot.lane.b32.xlu0 %v481, 64
        %v932 = vpop.permute.xlu0 %931
        %933 = vrot.lane.b32.xlu0 %v484, 64
        %v934 = vpop.permute.xlu0 %933
        %935 = vrot.lane.b32.xlu0 %v486, 64
        %v936 = vpop.permute.xlu0 %935
        %937 = vrot.lane.b32.xlu0 %v489, 64
        %v938 = vpop.permute.xlu0 %937
        %939 = vrot.lane.b32.xlu0 %v491, 64
        %v940 = vpop.permute.xlu0 %939
        %941 = vrot.lane.b32.xlu0 %v494, 64
        %v942 = vpop.permute.xlu0 %941
        %943 = vrot.lane.b32.xlu0 %v496, 64
        %v944 = vpop.permute.xlu0 %943
        %945 = vrot.lane.b32.xlu0 %v499, 64
        %v946 = vpop.permute.xlu0 %945
        %947 = vrot.lane.b32.xlu0 %v501, 64
        %v948 = vpop.permute.xlu0 %947
        %949 = vrot.lane.b32.xlu0 %v504, 64
        %v950 = vpop.permute.xlu0 %949
        %951 = vrot.lane.b32.xlu0 %v506, 64
        %v952 = vpop.permute.xlu0 %951
        %953 = vrot.lane.b32.xlu0 %v509, 64
        %v954 = vpop.permute.xlu0 %953
        %955 = vrot.lane.b32.xlu0 %v511, 64
        %v956 = vpop.permute.xlu0 %955
        %957 = vrot.lane.b32.xlu0 %v514, 64
        %v958 = vpop.permute.xlu0 %957
        %959 = vrot.lane.b32.xlu0 %v516, 64
        %v960 = vpop.permute.xlu0 %959
        %961 = vrot.lane.b32.xlu0 %v519, 64
        %v962 = vpop.permute.xlu0 %961
        %963 = vrot.lane.b32.xlu0 %v521, 64
        %v964 = vpop.permute.xlu0 %963
        %965 = vrot.lane.b32.xlu0 %v524, 64
        %v966 = vpop.permute.xlu0 %965
        %967 = vrot.lane.b32.xlu0 %v526, 64
        %v968 = vpop.permute.xlu0 %967
        %969 = vrot.lane.b32.xlu0 %v529, 64
        %v970 = vpop.permute.xlu0 %969
        %971 = vrot.lane.b32.xlu0 %v531, 64
        %v972 = vpop.permute.xlu0 %971
        %973 = vrot.lane.b32.xlu0 %v909, 64
        %v974 = vpop.permute.xlu0 %973
        %975 = vrot.lane.b32.xlu0 %v911, 64
        %v976 = vpop.permute.xlu0 %975
        %977 = vrot.lane.b32.xlu0 %v914, 64
        %v978 = vpop.permute.xlu0 %977
        %979 = vrot.lane.b32.xlu0 %v916, 64
        %v980 = vpop.permute.xlu0 %979
        %v1013 = vrot.slane %v391, 4
        %v1014 = vrot.slane %v392, 4
        %v1015 = vsel %vm628, %v1013, %v1014
        %v1016 = vrot.slane %v393, 4
        %v1017 = vsel %vm628, %v1014, %v1016
        %v1018 = vrot.slane %v394, 4
        %v1019 = vrot.slane %v395, 4
        %v1020 = vsel %vm628, %v1018, %v1019
        %v1021 = vrot.slane %v396, 4
        %v1022 = vsel %vm628, %v1019, %v1021
        %1023 = vrot.lane.b32.xlu0 %v641, 80
        %v1024 = vpop.permute.xlu0 %1023
        %1025 = vrot.lane.b32.xlu0 %v643, 80
        %v1026 = vpop.permute.xlu0 %1025
        %1027 = vrot.lane.b32.xlu0 %v646, 80
        %v1028 = vpop.permute.xlu0 %1027
        %1029 = vrot.lane.b32.xlu0 %v648, 80
        %v1030 = vpop.permute.xlu0 %1029
        %1031 = vrot.lane.b32.xlu0 %v651, 80
        %v1032 = vpop.permute.xlu0 %1031
        %1033 = vrot.lane.b32.xlu0 %v653, 80
        %v1034 = vpop.permute.xlu0 %1033
        %1035 = vrot.lane.b32.xlu0 %v656, 80
        %v1036 = vpop.permute.xlu0 %1035
        %1037 = vrot.lane.b32.xlu0 %v658, 80
        %v1038 = vpop.permute.xlu0 %1037
        %1039 = vrot.lane.b32.xlu0 %v661, 80
        %v1040 = vpop.permute.xlu0 %1039
        %1041 = vrot.lane.b32.xlu0 %v663, 80
        %v1042 = vpop.permute.xlu0 %1041
        %1043 = vrot.lane.b32.xlu0 %v666, 80
        %v1044 = vpop.permute.xlu0 %1043
        %1045 = vrot.lane.b32.xlu0 %v668, 80
        %v1046 = vpop.permute.xlu0 %1045
        %1047 = vrot.lane.b32.xlu0 %v671, 80
        %v1048 = vpop.permute.xlu0 %1047
        %1049 = vrot.lane.b32.xlu0 %v673, 80
        %v1050 = vpop.permute.xlu0 %1049
        %1051 = vrot.lane.b32.xlu0 %v676, 80
        %v1052 = vpop.permute.xlu0 %1051
        %1053 = vrot.lane.b32.xlu0 %v678, 80
        %v1054 = vpop.permute.xlu0 %1053
        %1055 = vrot.lane.b32.xlu0 %v681, 80
        %v1056 = vpop.permute.xlu0 %1055
        %1057 = vrot.lane.b32.xlu0 %v683, 80
        %v1058 = vpop.permute.xlu0 %1057
        %1059 = vrot.lane.b32.xlu0 %v686, 80
        %v1060 = vpop.permute.xlu0 %1059
        %1061 = vrot.lane.b32.xlu0 %v688, 80
        %v1062 = vpop.permute.xlu0 %1061
        %1063 = vrot.lane.b32.xlu0 %v691, 80
        %v1064 = vpop.permute.xlu0 %1063
        %1065 = vrot.lane.b32.xlu0 %v693, 80
        %v1066 = vpop.permute.xlu0 %1065
        %1067 = vrot.lane.b32.xlu0 %v696, 80
        %v1068 = vpop.permute.xlu0 %1067
        %1069 = vrot.lane.b32.xlu0 %v698, 80
        %v1070 = vpop.permute.xlu0 %1069
        %1071 = vrot.lane.b32.xlu0 %v701, 80
        %v1072 = vpop.permute.xlu0 %1071
        %1073 = vrot.lane.b32.xlu0 %v703, 80
        %v1074 = vpop.permute.xlu0 %1073
        %1075 = vrot.lane.b32.xlu0 %v706, 80
        %v1076 = vpop.permute.xlu0 %1075
        %1077 = vrot.lane.b32.xlu0 %v708, 80
        %v1078 = vpop.permute.xlu0 %1077
        %1079 = vrot.lane.b32.xlu0 %v1015, 80
        %v1080 = vpop.permute.xlu0 %1079
        %1081 = vrot.lane.b32.xlu0 %v1017, 80
        %v1082 = vpop.permute.xlu0 %1081
        %1083 = vrot.lane.b32.xlu0 %v1020, 80
        %v1084 = vpop.permute.xlu0 %1083
        %1085 = vrot.lane.b32.xlu0 %v1022, 80
        %v1086 = vpop.permute.xlu0 %1085
        %1123 = vrot.lane.b32.xlu0 %v355, 96
        %v1124 = vpop.permute.xlu0 %1123
        %1125 = vrot.lane.b32.xlu0 %v356, 96
        %v1126 = vpop.permute.xlu0 %1125
        %1127 = vrot.lane.b32.xlu0 %v358, 96
        %v1128 = vpop.permute.xlu0 %1127
        %1129 = vrot.lane.b32.xlu0 %v359, 96
        %v1130 = vpop.permute.xlu0 %1129
        %1131 = vrot.lane.b32.xlu0 %v361, 96
        %v1132 = vpop.permute.xlu0 %1131
        %1133 = vrot.lane.b32.xlu0 %v362, 96
        %v1134 = vpop.permute.xlu0 %1133
        %1135 = vrot.lane.b32.xlu0 %v364, 96
        %v1136 = vpop.permute.xlu0 %1135
        %1137 = vrot.lane.b32.xlu0 %v365, 96
        %v1138 = vpop.permute.xlu0 %1137
        %1139 = vrot.lane.b32.xlu0 %v367, 96
        %v1140 = vpop.permute.xlu0 %1139
        %1141 = vrot.lane.b32.xlu0 %v368, 96
        %v1142 = vpop.permute.xlu0 %1141
        %1143 = vrot.lane.b32.xlu0 %v370, 96
        %v1144 = vpop.permute.xlu0 %1143
        %1145 = vrot.lane.b32.xlu0 %v371, 96
        %v1146 = vpop.permute.xlu0 %1145
        %1147 = vrot.lane.b32.xlu0 %v373, 96
        %v1148 = vpop.permute.xlu0 %1147
        %1149 = vrot.lane.b32.xlu0 %v374, 96
        %v1150 = vpop.permute.xlu0 %1149
        %1151 = vrot.lane.b32.xlu0 %v376, 96
        %v1152 = vpop.permute.xlu0 %1151
        %1153 = vrot.lane.b32.xlu0 %v377, 96
        %v1154 = vpop.permute.xlu0 %1153
        %1155 = vrot.lane.b32.xlu0 %v379, 96
        %v1156 = vpop.permute.xlu0 %1155
        %1157 = vrot.lane.b32.xlu0 %v380, 96
        %v1158 = vpop.permute.xlu0 %1157
        %1159 = vrot.lane.b32.xlu0 %v382, 96
        %v1160 = vpop.permute.xlu0 %1159
        %1161 = vrot.lane.b32.xlu0 %v383, 96
        %v1162 = vpop.permute.xlu0 %1161
        %1163 = vrot.lane.b32.xlu0 %v385, 96
        %v1164 = vpop.permute.xlu0 %1163
        %1165 = vrot.lane.b32.xlu0 %v386, 96
        %v1166 = vpop.permute.xlu0 %1165
        %1167 = vrot.lane.b32.xlu0 %v388, 96
        %v1168 = vpop.permute.xlu0 %1167
        %1169 = vrot.lane.b32.xlu0 %v389, 96
        %v1170 = vpop.permute.xlu0 %1169
        %1171 = vrot.lane.b32.xlu0 %v391, 96
        %v1172 = vpop.permute.xlu0 %1171
        %1173 = vrot.lane.b32.xlu0 %v392, 96
        %v1174 = vpop.permute.xlu0 %1173
        %1175 = vrot.lane.b32.xlu0 %v394, 96
        %v1176 = vpop.permute.xlu0 %1175
        %1177 = vrot.lane.b32.xlu0 %v395, 96
        %v1178 = vpop.permute.xlu0 %1177
        %1179 = vrot.lane.b32.xlu0 %v397, 96
        %v1180 = vpop.permute.xlu0 %1179
        %1181 = vrot.lane.b32.xlu0 %v398, 96
        %v1182 = vpop.permute.xlu0 %1181
        %1183 = vrot.lane.b32.xlu0 %v400, 96
        %v1184 = vpop.permute.xlu0 %1183
        %1185 = vrot.lane.b32.xlu0 %v401, 96
        %v1186 = vpop.permute.xlu0 %1185
        %v1221 = vrot.slane %v397, 2
        %v1222 = vrot.slane %v398, 2
        %v1223 = vsel %vm451, %v1221, %v1222
        %v1224 = vrot.slane %v399, 2
        %v1225 = vsel %vm451, %v1222, %v1224
        %v1226 = vrot.slane %v400, 2
        %v1227 = vrot.slane %v401, 2
        %v1228 = vsel %vm451, %v1226, %v1227
        %v1229 = vrot.slane %v402, 2
        %v1230 = vsel %vm451, %v1227, %v1229
        %1231 = vrot.lane.b32.xlu0 %v474, 112
        %v1232 = vpop.permute.xlu0 %1231
        %1233 = vrot.lane.b32.xlu0 %v476, 112
        %v1234 = vpop.permute.xlu0 %1233
        %1235 = vrot.lane.b32.xlu0 %v479, 112
        %v1236 = vpop.permute.xlu0 %1235
        %1237 = vrot.lane.b32.xlu0 %v481, 112
        %v1238 = vpop.permute.xlu0 %1237
        %1239 = vrot.lane.b32.xlu0 %v484, 112
        %v1240 = vpop.permute.xlu0 %1239
        %1241 = vrot.lane.b32.xlu0 %v486, 112
        %v1242 = vpop.permute.xlu0 %1241
        %1243 = vrot.lane.b32.xlu0 %v489, 112
        %v1244 = vpop.permute.xlu0 %1243
        %1245 = vrot.lane.b32.xlu0 %v491, 112
        %v1246 = vpop.permute.xlu0 %1245
        %1247 = vrot.lane.b32.xlu0 %v494, 112
        %v1248 = vpop.permute.xlu0 %1247
        %1249 = vrot.lane.b32.xlu0 %v496, 112
        %v1250 = vpop.permute.xlu0 %1249
        %1251 = vrot.lane.b32.xlu0 %v499, 112
        %v1252 = vpop.permute.xlu0 %1251
        %1253 = vrot.lane.b32.xlu0 %v501, 112
        %v1254 = vpop.permute.xlu0 %1253
        %1255 = vrot.lane.b32.xlu0 %v504, 112
        %v1256 = vpop.permute.xlu0 %1255
        %1257 = vrot.lane.b32.xlu0 %v506, 112
        %v1258 = vpop.permute.xlu0 %1257
        %1259 = vrot.lane.b32.xlu0 %v509, 112
        %v1260 = vpop.permute.xlu0 %1259
        %1261 = vrot.lane.b32.xlu0 %v511, 112
        %v1262 = vpop.permute.xlu0 %1261
        %1263 = vrot.lane.b32.xlu0 %v514, 112
        %v1264 = vpop.permute.xlu0 %1263
        %1265 = vrot.lane.b32.xlu0 %v516, 112
        %v1266 = vpop.permute.xlu0 %1265
        %1267 = vrot.lane.b32.xlu0 %v519, 112
        %v1268 = vpop.permute.xlu0 %1267
        %1269 = vrot.lane.b32.xlu0 %v521, 112
        %v1270 = vpop.permute.xlu0 %1269
        %1271 = vrot.lane.b32.xlu0 %v524, 112
        %v1272 = vpop.permute.xlu0 %1271
        %1273 = vrot.lane.b32.xlu0 %v526, 112
        %v1274 = vpop.permute.xlu0 %1273
        %1275 = vrot.lane.b32.xlu0 %v529, 112
        %v1276 = vpop.permute.xlu0 %1275
        %1277 = vrot.lane.b32.xlu0 %v531, 112
        %v1278 = vpop.permute.xlu0 %1277
        %1279 = vrot.lane.b32.xlu0 %v909, 112
        %v1280 = vpop.permute.xlu0 %1279
        %1281 = vrot.lane.b32.xlu0 %v911, 112
        %v1282 = vpop.permute.xlu0 %1281
        %1283 = vrot.lane.b32.xlu0 %v914, 112
        %v1284 = vpop.permute.xlu0 %1283
        %1285 = vrot.lane.b32.xlu0 %v916, 112
        %v1286 = vpop.permute.xlu0 %1285
        %1287 = vrot.lane.b32.xlu0 %v1223, 112
        %v1288 = vpop.permute.xlu0 %1287
        %1289 = vrot.lane.b32.xlu0 %v1225, 112
        %v1290 = vpop.permute.xlu0 %1289
        %1291 = vrot.lane.b32.xlu0 %v1228, 112
        %v1292 = vpop.permute.xlu0 %1291
        %1293 = vrot.lane.b32.xlu0 %v1230, 112
        %v1294 = vpop.permute.xlu0 %1293
        %v1327 = vrot.slane %v397, 4
        %v1328 = vrot.slane %v398, 4
        %v1329 = vsel %vm628, %v1327, %v1328
        %v1330 = vrot.slane %v399, 4
        %v1331 = vsel %vm628, %v1328, %v1330
        %v1332 = vrot.slane %v400, 4
        %v1333 = vrot.slane %v401, 4
        %v1334 = vsel %vm628, %v1332, %v1333
        %v1335 = vrot.slane %v402, 4
        %v1336 = vsel %vm628, %v1333, %v1335
        %v1337 = vsel %vm216, %v343, %v533
        %v1338 = vsel %vm216, %v344, %v535
        %v1339 = vsel %vm216, %v346, %v537
        %v1340 = vsel %vm216, %v347, %v539
        %v1341 = vsel %vm216, %v349, %v541
        %v1342 = vsel %vm216, %v350, %v543
        %v1343 = vsel %vm216, %v352, %v545
        %v1344 = vsel %vm216, %v353, %v547
        %v1345 = vsel %vm216, %v355, %v549
        %v1346 = vsel %vm216, %v356, %v551
        %v1347 = vsel %vm216, %v358, %v553
        %v1348 = vsel %vm216, %v359, %v555
        %v1349 = vsel %vm216, %v361, %v557
        %v1350 = vsel %vm216, %v362, %v559
        %v1351 = vsel %vm216, %v364, %v561
        %v1352 = vsel %vm216, %v365, %v563
        %v1353 = vsel %vm216, %v367, %v565
        %v1354 = vsel %vm216, %v368, %v567
        %v1355 = vsel %vm216, %v370, %v569
        %v1356 = vsel %vm216, %v371, %v571
        %v1357 = vsel %vm216, %v373, %v573
        %v1358 = vsel %vm216, %v374, %v575
        %v1359 = vsel %vm216, %v376, %v577
        %v1360 = vsel %vm216, %v377, %v579
        %v1361 = vsel %vm216, %v379, %v581
        %v1362 = vsel %vm216, %v380, %v583
        %v1363 = vsel %vm216, %v382, %v585
        %v1364 = vsel %vm216, %v383, %v587
        %v1365 = vsel %vm216, %v385, %v589
        %v1366 = vsel %vm216, %v386, %v591
        %v1367 = vsel %vm216, %v388, %v593
        %v1368 = vsel %vm216, %v389, %v595
        %vm1369 = vcmask 261120
        %v1370 = vsel %vm1369, %v1337, %v710
        %v1371 = vsel %vm1369, %v1338, %v712
        %v1372 = vsel %vm1369, %v1339, %v714
        %v1373 = vsel %vm1369, %v1340, %v716
        %v1374 = vsel %vm1369, %v1341, %v718
        %v1375 = vsel %vm1369, %v1342, %v720
        %v1376 = vsel %vm1369, %v1343, %v722
        %v1377 = vsel %vm1369, %v1344, %v724
        %v1378 = vsel %vm1369, %v1345, %v726
        %v1379 = vsel %vm1369, %v1346, %v728
        %v1380 = vsel %vm1369, %v1347, %v730
        %v1381 = vsel %vm1369, %v1348, %v732
        %v1382 = vsel %vm1369, %v1349, %v734
        %v1383 = vsel %vm1369, %v1350, %v736
        %v1384 = vsel %vm1369, %v1351, %v738
        %v1385 = vsel %vm1369, %v1352, %v740
        %v1386 = vsel %vm1369, %v1353, %v742
        %v1387 = vsel %vm1369, %v1354, %v744
        %v1388 = vsel %vm1369, %v1355, %v746
        %v1389 = vsel %vm1369, %v1356, %v748
        %v1390 = vsel %vm1369, %v1357, %v750
        %v1391 = vsel %vm1369, %v1358, %v752
        %v1392 = vsel %vm1369, %v1359, %v754
        %v1393 = vsel %vm1369, %v1360, %v756
        %v1394 = vsel %vm1369, %v1361, %v758
        %v1395 = vsel %vm1369, %v1362, %v760
        %v1396 = vsel %vm1369, %v1363, %v762
        %v1397 = vsel %vm1369, %v1364, %v764
        %v1398 = vsel %vm1369, %v1365, %v766
        %v1399 = vsel %vm1369, %v1366, %v768
        %v1400 = vsel %vm1369, %v1367, %v770
        %v1401 = vsel %vm1369, %v1368, %v772
        %vm1402 = vcmask 392192
        %v1403 = vsel %vm1402, %v1370, %v810
        %v1404 = vsel %vm1402, %v1371, %v812
        %v1405 = vsel %vm1402, %v1372, %v814
        %v1406 = vsel %vm1402, %v1373, %v816
        %v1407 = vsel %vm1402, %v1374, %v818
        %v1408 = vsel %vm1402, %v1375, %v820
        %v1409 = vsel %vm1402, %v1376, %v822
        %v1410 = vsel %vm1402, %v1377, %v824
        %v1411 = vsel %vm1402, %v1378, %v826
        %v1412 = vsel %vm1402, %v1379, %v828
        %v1413 = vsel %vm1402, %v1380, %v830
        %v1414 = vsel %vm1402, %v1381, %v832
        %v1415 = vsel %vm1402, %v1382, %v834
        %v1416 = vsel %vm1402, %v1383, %v836
        %v1417 = vsel %vm1402, %v1384, %v838
        %v1418 = vsel %vm1402, %v1385, %v840
        %v1419 = vsel %vm1402, %v1386, %v842
        %v1420 = vsel %vm1402, %v1387, %v844
        %v1421 = vsel %vm1402, %v1388, %v846
        %v1422 = vsel %vm1402, %v1389, %v848
        %v1423 = vsel %vm1402, %v1390, %v850
        %v1424 = vsel %vm1402, %v1391, %v852
        %v1425 = vsel %vm1402, %v1392, %v854
        %v1426 = vsel %vm1402, %v1393, %v856
        %v1427 = vsel %vm1402, %v1394, %v858
        %v1428 = vsel %vm1402, %v1395, %v860
        %v1429 = vsel %vm1402, %v1396, %v862
        %v1430 = vsel %vm1402, %v1397, %v864
        %v1431 = vsel %vm1402, %v1398, %v866
        %v1432 = vsel %vm1402, %v1399, %v868
        %v1433 = vsel %vm1402, %v1400, %v870
        %v1434 = vsel %vm1402, %v1401, %v872
        %vm1435 = vcmask 523264
        %v1436 = vsel %vm1435, %v1403, %v918
        %v1437 = vsel %vm1435, %v1404, %v920
        %v1438 = vsel %vm1435, %v1405, %v922
        %v1439 = vsel %vm1435, %v1406, %v924
        %v1440 = vsel %vm1435, %v1407, %v926
        %v1441 = vsel %vm1435, %v1408, %v928
        %v1442 = vsel %vm1435, %v1409, %v930
        %v1443 = vsel %vm1435, %v1410, %v932
        %v1444 = vsel %vm1435, %v1411, %v934
        %v1445 = vsel %vm1435, %v1412, %v936
        %v1446 = vsel %vm1435, %v1413, %v938
        %v1447 = vsel %vm1435, %v1414, %v940
        %v1448 = vsel %vm1435, %v1415, %v942
        %v1449 = vsel %vm1435, %v1416, %v944
        %v1450 = vsel %vm1435, %v1417, %v946
        %v1451 = vsel %vm1435, %v1418, %v948
        %v1452 = vsel %vm1435, %v1419, %v950
        %v1453 = vsel %vm1435, %v1420, %v952
        %v1454 = vsel %vm1435, %v1421, %v954
        %v1455 = vsel %vm1435, %v1422, %v956
        %v1456 = vsel %vm1435, %v1423, %v958
        %v1457 = vsel %vm1435, %v1424, %v960
        %v1458 = vsel %vm1435, %v1425, %v962
        %v1459 = vsel %vm1435, %v1426, %v964
        %v1460 = vsel %vm1435, %v1427, %v966
        %v1461 = vsel %vm1435, %v1428, %v968
        %v1462 = vsel %vm1435, %v1429, %v970
        %v1463 = vsel %vm1435, %v1430, %v972
        %v1464 = vsel %vm1435, %v1431, %v974
        %v1465 = vsel %vm1435, %v1432, %v976
        %v1466 = vsel %vm1435, %v1433, %v978
        %v1467 = vsel %vm1435, %v1434, %v980
        %vm1468 = vcmask 654336
        %v1469 = vsel %vm1468, %v1436, %v1024
        %v1470 = vsel %vm1468, %v1437, %v1026
        %v1471 = vsel %vm1468, %v1438, %v1028
        %v1472 = vsel %vm1468, %v1439, %v1030
        %v1473 = vsel %vm1468, %v1440, %v1032
        %v1474 = vsel %vm1468, %v1441, %v1034
        %v1475 = vsel %vm1468, %v1442, %v1036
        %v1476 = vsel %vm1468, %v1443, %v1038
        %v1477 = vsel %vm1468, %v1444, %v1040
        %v1478 = vsel %vm1468, %v1445, %v1042
        %v1479 = vsel %vm1468, %v1446, %v1044
        %v1480 = vsel %vm1468, %v1447, %v1046
        %v1481 = vsel %vm1468, %v1448, %v1048
        %v1482 = vsel %vm1468, %v1449, %v1050
        %v1483 = vsel %vm1468, %v1450, %v1052
        %v1484 = vsel %vm1468, %v1451, %v1054
        %v1485 = vsel %vm1468, %v1452, %v1056
        %v1486 = vsel %vm1468, %v1453, %v1058
        %v1487 = vsel %vm1468, %v1454, %v1060
        %v1488 = vsel %vm1468, %v1455, %v1062
        %v1489 = vsel %vm1468, %v1456, %v1064
        %v1490 = vsel %vm1468, %v1457, %v1066
        %v1491 = vsel %vm1468, %v1458, %v1068
        %v1492 = vsel %vm1468, %v1459, %v1070
        %v1493 = vsel %vm1468, %v1460, %v1072
        %v1494 = vsel %vm1468, %v1461, %v1074
        %v1495 = vsel %vm1468, %v1462, %v1076
        %v1496 = vsel %vm1468, %v1463, %v1078
        %v1497 = vsel %vm1468, %v1464, %v1080
        %v1498 = vsel %vm1468, %v1465, %v1082
        %v1499 = vsel %vm1468, %v1466, %v1084
        %v1500 = vsel %vm1468, %v1467, %v1086
        %vm1501 = vcmask 785408
        %v1502 = vsel %vm1501, %v1469, %v1124
        %v1503 = vsel %vm1501, %v1470, %v1126
        %v1504 = vsel %vm1501, %v1471, %v1128
        %v1505 = vsel %vm1501, %v1472, %v1130
        %v1506 = vsel %vm1501, %v1473, %v1132
        %v1507 = vsel %vm1501, %v1474, %v1134
        %v1508 = vsel %vm1501, %v1475, %v1136
        %v1509 = vsel %vm1501, %v1476, %v1138
        %v1510 = vsel %vm1501, %v1477, %v1140
        %v1511 = vsel %vm1501, %v1478, %v1142
        %v1512 = vsel %vm1501, %v1479, %v1144
        %v1513 = vsel %vm1501, %v1480, %v1146
        %v1514 = vsel %vm1501, %v1481, %v1148
        %v1515 = vsel %vm1501, %v1482, %v1150
        %v1516 = vsel %vm1501, %v1483, %v1152
        %v1517 = vsel %vm1501, %v1484, %v1154
        %v1518 = vsel %vm1501, %v1485, %v1156
        %v1519 = vsel %vm1501, %v1486, %v1158
        %v1520 = vsel %vm1501, %v1487, %v1160
        %v1521 = vsel %vm1501, %v1488, %v1162
        %v1522 = vsel %vm1501, %v1489, %v1164
        %v1523 = vsel %vm1501, %v1490, %v1166
        %v1524 = vsel %vm1501, %v1491, %v1168
        %v1525 = vsel %vm1501, %v1492, %v1170
        %v1526 = vsel %vm1501, %v1493, %v1172
        %v1527 = vsel %vm1501, %v1494, %v1174
        %v1528 = vsel %vm1501, %v1495, %v1176
        %v1529 = vsel %vm1501, %v1496, %v1178
        %v1530 = vsel %vm1501, %v1497, %v1180
        %v1531 = vsel %vm1501, %v1498, %v1182
        %v1532 = vsel %vm1501, %v1499, %v1184
        %v1533 = vsel %vm1501, %v1500, %v1186
        %vm1534 = vcmask 916480
        %v1535 = vsel %vm1534, %v1502, %v1232
        %v1536 = vsel %vm1534, %v1503, %v1234
        %v1537 = vsel %vm1534, %v1504, %v1236
        %v1538 = vsel %vm1534, %v1505, %v1238
        %v1539 = vsel %vm1534, %v1506, %v1240
        %v1540 = vsel %vm1534, %v1507, %v1242
        %v1541 = vsel %vm1534, %v1508, %v1244
        %v1542 = vsel %vm1534, %v1509, %v1246
        %v1543 = vsel %vm1534, %v1510, %v1248
        %v1544 = vsel %vm1534, %v1511, %v1250
        %v1545 = vsel %vm1534, %v1512, %v1252
        %v1546 = vsel %vm1534, %v1513, %v1254
        %v1547 = vsel %vm1534, %v1514, %v1256
        %v1548 = vsel %vm1534, %v1515, %v1258
        %v1549 = vsel %vm1534, %v1516, %v1260
        %v1550 = vsel %vm1534, %v1517, %v1262
        %v1551 = vsel %vm1534, %v1518, %v1264
        %v1552 = vsel %vm1534, %v1519, %v1266
        %v1553 = vsel %vm1534, %v1520, %v1268
        %v1554 = vsel %vm1534, %v1521, %v1270
        %v1555 = vsel %vm1534, %v1522, %v1272
        %v1556 = vsel %vm1534, %v1523, %v1274
        %v1557 = vsel %vm1534, %v1524, %v1276
        %v1558 = vsel %vm1534, %v1525, %v1278
        %v1559 = vsel %vm1534, %v1526, %v1280
        %v1560 = vsel %vm1534, %v1527, %v1282
        %v1561 = vsel %vm1534, %v1528, %v1284
        %v1562 = vsel %vm1534, %v1529, %v1286
        %v1563 = vsel %vm1534, %v1530, %v1288
        %v1564 = vsel %vm1534, %v1531, %v1290
        %v1565 = vsel %vm1534, %v1532, %v1292
        %v1566 = vsel %vm1534, %v1533, %v1294
        %v1567 = vld [vmem:[%s1] sm:$0xff]
        %v1568 = vld [vmem:[%s1 + $0x8] sm:$0xff]
        %v1569 = vld [vmem:[%s1 + $0x10] sm:$0xff]
        %v1570 = vld [vmem:[%s1 + $0x18] sm:$0xff]
        %v1571 = vld [vmem:[%s1 + $0x20] sm:$0xff]
        %v1572 = vld [vmem:[%s1 + $0x28] sm:$0xff]
        %v1573 = vld [vmem:[%s1 + $0x30] sm:$0xff]
        %v1574 = vld [vmem:[%s1 + $0x38] sm:$0xff]
        %v1575 = vld [vmem:[%s1 + $0x40] sm:$0xff]
        %v1576 = vld [vmem:[%s1 + $0x48] sm:$0xff]
        %v1577 = vld [vmem:[%s1 + $0x50] sm:$0xff]
        %v1578 = vld [vmem:[%s1 + $0x58] sm:$0xff]
        %v1579 = vld [vmem:[%s1 + $0x60] sm:$0xff]
        %v1580 = vld [vmem:[%s1 + $0x68] sm:$0xff]
        %v1581 = vld [vmem:[%s1 + $0x70] sm:$0xff]
        %v1582 = vld [vmem:[%s1 + $0x78] sm:$0xff]
        %v1583 = vld [vmem:[%s1 + $0x80] sm:$0xff]
        %v1584 = vld [vmem:[%s1 + $0x88] sm:$0xff]
        %v1585 = vsel %vm216, %v651, 0
        %v1587 = vsel %vm216, %v653, 0
        %v1589 = vsel %vm216, %v656, 0
        %v1591 = vsel %vm216, %v658, 0
        %v1593 = vsel %vm216, %v661, 0
        %v1595 = vsel %vm216, %v663, 0
        %v1597 = vsel %vm216, %v666, 0
        %v1599 = vsel %vm216, %v668, 0
        %v1601 = vsel %vm216, %v671, 0
        %v1603 = vsel %vm216, %v673, 0
        %v1605 = vsel %vm216, %v676, 0
        %v1607 = vsel %vm216, %v678, 0
        %v1609 = vsel %vm216, %v681, 0
        %v1611 = vsel %vm216, %v683, 0
        %v1613 = vsel %vm216, %v686, 0
        %v1615 = vsel %vm216, %v688, 0
        %v1617 = vsel %vm216, %v691, 0
        %v1619 = vsel %vm216, %v693, 0
        %v1621 = vsel %vm216, %v696, 0
        %v1623 = vsel %vm216, %v698, 0
        %v1625 = vsel %vm216, %v701, 0
        %v1627 = vsel %vm216, %v703, 0
        %v1629 = vsel %vm216, %v706, 0
        %v1631 = vsel %vm216, %v708, 0
        %v1633 = vsel %vm216, %v1015, 0
        %v1635 = vsel %vm216, %v1017, 0
        %v1637 = vsel %vm216, %v1020, 0
        %v1639 = vsel %vm216, %v1022, 0
        %v1641 = vsel %vm216, %v1329, 0
        %v1643 = vsel %vm216, %v1331, 0
        %v1645 = vsel %vm216, %v1334, 0
        %v1647 = vsel %vm216, %v1336, 0
        %1649 = vmatprep.subr.mxu0 0.0
        %1650 = vmatpush1.msra.mxu0 %v1567
        %1651 = vmatprep.subr.mxu0 0.0
        %1652 = vmatpush1.msra.mxu0 %v1568
        %1653 = vmatprep.subr.mxu0 0.0
        %1654 = vmatpush1.msra.mxu0 %v1569
        %1655 = vmatprep.subr.mxu0 0.0
        %1656 = vmatpush1.msra.mxu0 %v1570
        %1657 = vmatprep.subr.mxu0 0.0
        %1658 = vmatpush1.msra.mxu0 %v1571
        %1659 = vmatprep.subr.mxu0 0.0
        %1660 = vmatpush1.msra.mxu0 %v1572
        %1661 = vmatprep.subr.mxu0 0.0
        %1662 = vmatpush1.msra.mxu0 %v1573
        %1663 = vmatprep.subr.mxu0 0.0
        %1664 = vmatpush1.msra.mxu0 %v1574
        %1665 = vmatprep.subr.mxu0 0.0
        %1666 = vmatpush1.msra.mxu0 %v1575
        %1667 = vmatprep.subr.mxu0 0.0
        %1668 = vmatpush1.msra.mxu0 %v1576
        %1669 = vmatprep.subr.mxu0 0.0
        %1670 = vmatpush1.msra.mxu0 %v1577
        %1671 = vmatprep.subr.mxu0 0.0
        %1672 = vmatpush1.msra.mxu0 %v1578
        %1673 = vmatprep.subr.mxu0 0.0
        %1674 = vmatpush1.msra.mxu0 %v1579
        %1675 = vmatprep.subr.mxu0 0.0
        %1676 = vmatpush1.msra.mxu0 %v1580
        %1677 = vmatprep.subr.mxu0 0.0
        %1678 = vmatpush1.msra.mxu0 %v1581
        %1679 = vmatprep.subr.mxu0 0.0
        %1680 = vmatpush1.msra.mxu0 %v1582
        %1681 = vmatprep.subr.mxu0 0.0
        %1682 = vmatpush1.msra.mxu0 %v1583
        %1683 = vmatprep.subr.mxu0 0.0
        %1684 = vmatpush1.msra.mxu0 %v1584
        %1685 = vmatprep.subr.mxu0 0.0
        %1686 = vmatpush1.msra.mxu0 0.0
        %1687 = vmatprep.subr.mxu0 0.0
        %1688 = vmatpush1.msra.mxu0 0.0
        %1689 = vmatprep.subr.mxu0 0.0
        %1690 = vmatpush1.msra.mxu0 0.0
        %1691 = vmatprep.subr.mxu0 0.0
        %1692 = vmatpush1.msra.mxu0 0.0
        %1693 = vmatprep.subr.mxu0 0.0
        %1694 = vmatpush1.msra.mxu0 0.0
        %1695 = vmatprep.subr.mxu0 0.0
        %1696 = vmatpush1.msra.mxu0 0.0
        %1697 = vmatprep.subr.mxu0 0.0
        %1698 = vmatpush1.msra.mxu0 0.0
        %1699 = vmatprep.subr.mxu0 0.0
        %1700 = vmatpush1.msra.mxu0 0.0
        %1701 = vmatprep.subr.mxu0 0.0
        %1702 = vmatpush1.msra.mxu0 0.0
        %1703 = vmatprep.subr.mxu0 0.0
        %1704 = vmatpush1.msra.mxu0 0.0
        %1705 = vmatprep.subr.mxu0 0.0
        %1706 = vmatpush1.msra.mxu0 0.0
        %1707 = vmatprep.subr.mxu0 0.0
        %1708 = vmatpush1.msra.mxu0 0.0
        %1709 = vmatprep.subr.mxu0 0.0
        %1710 = vmatpush1.msra.mxu0 0.0
        %1711 = vmatprep.subr.mxu0 0.0
        %1712 = vmatpush1.msra.mxu0 0.0
        %1713 = vmatprep.mubr.f32.mxu0 %v1585
        %1714 = vmatmul.mubr.f32.gmra.mrb[0].mxu0 %v1535
        %v1715 = vpop.f32.mrb[0].mxu0
        %v1716 = vadd.f32 0.0, %v1715
        %v1717 = vpop.f32.mrb[0].mxu0
        %1718 = vmatprep.mubr.f32.mxu0 %v1587
        %1719 = vmatmul.mubr.f32.gmra.mrb[0].mxu0 %v1536
        %v1720 = vpop.f32.mrb[0].mxu0
        %v1721 = vadd.f32 0.0, %v1720
        %v1722 = vpop.f32.mrb[0].mxu0
        %1723 = vmatprep.mubr.f32.mxu0 %v1589
        %1724 = vmatmul.mubr.f32.gmra.mrb[0].mxu0 %v1537
        %v1725 = vpop.f32.mrb[0].mxu0
        %v1726 = vadd.f32 0.0, %v1725
        %v1727 = vpop.f32.mrb[0].mxu0
        %1728 = vmatprep.mubr.f32.mxu0 %v1591
        %1729 = vmatmul.mubr.f32.gmra.mrb[0].mxu0 %v1538
        %v1730 = vpop.f32.mrb[0].mxu0
        %v1731 = vadd.f32 0.0, %v1730
        %v1732 = vpop.f32.mrb[0].mxu0
        %1733 = vmatprep.mubr.f32.mxu0 %v1593
        %1734 = vmatmul.mubr.f32.gmra.mrb[0].mxu0 %v1539
        %v1735 = vpop.f32.mrb[0].mxu0
        %v1736 = vadd.f32 0.0, %v1735
        %v1737 = vpop.f32.mrb[0].mxu0
        %1738 = vmatprep.mubr.f32.mxu0 %v1595
        %1739 = vmatmul.mubr.f32.gmra.mrb[0].mxu0 %v1540
        %v1740 = vpop.f32.mrb[0].mxu0
        %v1741 = vadd.f32 0.0, %v1740
        %v1742 = vpop.f32.mrb[0].mxu0
        %1743 = vmatprep.mubr.f32.mxu0 %v1597
        %1744 = vmatmul.mubr.f32.gmra.mrb[0].mxu0 %v1541
        %v1745 = vpop.f32.mrb[0].mxu0
        %v1746 = vadd.f32 0.0, %v1745
        %v1747 = vpop.f32.mrb[0].mxu0
        %1748 = vmatprep.mubr.f32.mxu0 %v1599
        %1749 = vmatmul.mubr.f32.gmra.mrb[0].mxu0 %v1542
        %v1750 = vpop.f32.mrb[0].mxu0
        %v1751 = vadd.f32 0.0, %v1750
        %v1752 = vpop.f32.mrb[0].mxu0
        %1753 = vmatprep.mubr.f32.mxu0 %v1601
        %1754 = vmatmul.mubr.f32.gmra.mrb[0].mxu0 %v1543
        %v1755 = vpop.f32.mrb[0].mxu0
        %v1756 = vadd.f32 0.0, %v1755
        %v1757 = vpop.f32.mrb[0].mxu0
        %1758 = vmatprep.mubr.f32.mxu0 %v1603
        %1759 = vmatmul.mubr.f32.gmra.mrb[0].mxu0 %v1544
        %v1760 = vpop.f32.mrb[0].mxu0
        %v1761 = vadd.f32 0.0, %v1760
        %v1762 = vpop.f32.mrb[0].mxu0
        %1763 = vmatprep.mubr.f32.mxu0 %v1605
        %1764 = vmatmul.mubr.f32.gmra.mrb[0].mxu0 %v1545
        %v1765 = vpop.f32.mrb[0].mxu0
        %v1766 = vadd.f32 0.0, %v1765
        %v1767 = vpop.f32.mrb[0].mxu0
        %1768 = vmatprep.mubr.f32.mxu0 %v1607
        %1769 = vmatmul.mubr.f32.gmra.mrb[0].mxu0 %v1546
        %v1770 = vpop.f32.mrb[0].mxu0
        %v1771 = vadd.f32 0.0, %v1770
        %v1772 = vpop.f32.mrb[0].mxu0
        %1773 = vmatprep.mubr.f32.mxu0 %v1609
        %1774 = vmatmul.mubr.f32.gmra.mrb[0].mxu0 %v1547
        %v1775 = vpop.f32.mrb[0].mxu0
        %v1776 = vadd.f32 0.0, %v1775
        %v1777 = vpop.f32.mrb[0].mxu0
        %1778 = vmatprep.mubr.f32.mxu0 %v1611
        %1779 = vmatmul.mubr.f32.gmra.mrb[0].mxu0 %v1548
        %v1780 = vpop.f32.mrb[0].mxu0
        %v1781 = vadd.f32 0.0, %v1780
        %v1782 = vpop.f32.mrb[0].mxu0
        %1783 = vmatprep.mubr.f32.mxu0 %v1613
        %1784 = vmatmul.mubr.f32.gmra.mrb[0].mxu0 %v1549
        %v1785 = vpop.f32.mrb[0].mxu0
        %v1786 = vadd.f32 0.0, %v1785
        %v1787 = vpop.f32.mrb[0].mxu0
        %1788 = vmatprep.mubr.f32.mxu0 %v1615
        %1789 = vmatmul.mubr.f32.gmra.mrb[0].mxu0 %v1550
        %v1790 = vpop.f32.mrb[0].mxu0
        %v1791 = vadd.f32 0.0, %v1790
        %v1792 = vpop.f32.mrb[0].mxu0
        %1793 = vmatprep.mubr.f32.mxu0 %v1617
        %1794 = vmatmul.mubr.f32.gmra.mrb[0].mxu0 %v1551
        %v1795 = vpop.f32.mrb[0].mxu0
        %v1796 = vadd.f32 0.0, %v1795
        %v1797 = vpop.f32.mrb[0].mxu0
        %1798 = vmatprep.mubr.f32.mxu0 %v1619
        %1799 = vmatmul.mubr.f32.gmra.mrb[0].mxu0 %v1552
        %v1800 = vpop.f32.mrb[0].mxu0
        %v1801 = vadd.f32 0.0, %v1800
        %v1802 = vpop.f32.mrb[0].mxu0
        %1803 = vmatprep.mubr.f32.mxu0 %v1621
        %1804 = vmatmul.mubr.f32.gmra.mrb[0].mxu0 %v1553
        %v1805 = vpop.f32.mrb[0].mxu0
        %v1806 = vadd.f32 0.0, %v1805
        %v1807 = vpop.f32.mrb[0].mxu0
        %1808 = vmatprep.mubr.f32.mxu0 %v1623
        %1809 = vmatmul.mubr.f32.gmra.mrb[0].mxu0 %v1554
        %v1810 = vpop.f32.mrb[0].mxu0
        %v1811 = vadd.f32 0.0, %v1810
        %v1812 = vpop.f32.mrb[0].mxu0
        %1813 = vmatprep.mubr.f32.mxu0 %v1625
        %1814 = vmatmul.mubr.f32.gmra.mrb[0].mxu0 %v1555
        %v1815 = vpop.f32.mrb[0].mxu0
        %v1816 = vadd.f32 0.0, %v1815
        %v1817 = vpop.f32.mrb[0].mxu0
        %1818 = vmatprep.mubr.f32.mxu0 %v1627
        %1819 = vmatmul.mubr.f32.gmra.mrb[0].mxu0 %v1556
        %v1820 = vpop.f32.mrb[0].mxu0
        %v1821 = vadd.f32 0.0, %v1820
        %v1822 = vpop.f32.mrb[0].mxu0
        %1823 = vmatprep.mubr.f32.mxu0 %v1629
        %1824 = vmatmul.mubr.f32.gmra.mrb[0].mxu0 %v1557
        %v1825 = vpop.f32.mrb[0].mxu0
        %v1826 = vadd.f32 0.0, %v1825
        %v1827 = vpop.f32.mrb[0].mxu0
        %1828 = vmatprep.mubr.f32.mxu0 %v1631
        %1829 = vmatmul.mubr.f32.gmra.mrb[0].mxu0 %v1558
        %v1830 = vpop.f32.mrb[0].mxu0
        %v1831 = vadd.f32 0.0, %v1830
        %v1832 = vpop.f32.mrb[0].mxu0
        %1833 = vmatprep.mubr.f32.mxu0 %v1633
        %1834 = vmatmul.mubr.f32.gmra.mrb[0].mxu0 %v1559
        %v1835 = vpop.f32.mrb[0].mxu0
        %v1836 = vadd.f32 0.0, %v1835
        %v1837 = vpop.f32.mrb[0].mxu0
        %1838 = vmatprep.mubr.f32.mxu0 %v1635
        %1839 = vmatmul.mubr.f32.gmra.mrb[0].mxu0 %v1560
        %v1840 = vpop.f32.mrb[0].mxu0
        %v1841 = vadd.f32 0.0, %v1840
        %v1842 = vpop.f32.mrb[0].mxu0
        %1843 = vmatprep.mubr.f32.mxu0 %v1637
        %1844 = vmatmul.mubr.f32.gmra.mrb[0].mxu0 %v1561
        %v1845 = vpop.f32.mrb[0].mxu0
        %v1846 = vadd.f32 0.0, %v1845
        %v1847 = vpop.f32.mrb[0].mxu0
        %1848 = vmatprep.mubr.f32.mxu0 %v1639
        %1849 = vmatmul.mubr.f32.gmra.mrb[0].mxu0 %v1562
        %v1850 = vpop.f32.mrb[0].mxu0
        %v1851 = vadd.f32 0.0, %v1850
        %v1852 = vpop.f32.mrb[0].mxu0
        %1853 = vmatprep.mubr.f32.mxu0 %v1641
        %1854 = vmatmul.mubr.f32.gmra.mrb[0].mxu0 %v1563
        %v1855 = vpop.f32.mrb[0].mxu0
        %v1856 = vadd.f32 0.0, %v1855
        %v1857 = vpop.f32.mrb[0].mxu0
        %1858 = vmatprep.mubr.f32.mxu0 %v1643
        %1859 = vmatmul.mubr.f32.gmra.mrb[0].mxu0 %v1564
        %v1860 = vpop.f32.mrb[0].mxu0
        %v1861 = vadd.f32 0.0, %v1860
        %v1862 = vpop.f32.mrb[0].mxu0
        %1863 = vmatprep.mubr.f32.mxu0 %v1645
        %1864 = vmatmul.mubr.f32.gmra.mrb[0].mxu0 %v1565
        %v1865 = vpop.f32.mrb[0].mxu0
        %v1866 = vadd.f32 0.0, %v1865
        %v1867 = vpop.f32.mrb[0].mxu0
        %1868 = vmatprep.mubr.f32.mxu0 %v1647
        %1869 = vmatmul.mubr.f32.gmra.mrb[0].mxu0 %v1566
        %v1870 = vpop.f32.mrb[0].mxu0
        %v1871 = vadd.f32 0.0, %v1870
        %v1872 = vpop.f32.mrb[0].mxu0
        %1873 = vdwg.mxu0
        %v1874 = vmax.f32 %v1716, 0.0
        %v1875 = vmax.f32 %v1721, 0.0
        %v1876 = vmax.f32 %v1726, 0.0
        %v1877 = vmax.f32 %v1731, 0.0
        %v1878 = vmax.f32 %v1736, 0.0
        %v1879 = vmax.f32 %v1741, 0.0
        %v1880 = vmax.f32 %v1746, 0.0
        %v1881 = vmax.f32 %v1751, 0.0
        %v1882 = vmax.f32 %v1756, 0.0
        %v1883 = vmax.f32 %v1761, 0.0
        %v1884 = vmax.f32 %v1766, 0.0
        %v1885 = vmax.f32 %v1771, 0.0
        %v1886 = vmax.f32 %v1776, 0.0
        %v1887 = vmax.f32 %v1781, 0.0
        %v1888 = vmax.f32 %v1786, 0.0
        %v1889 = vmax.f32 %v1791, 0.0
        %v1890 = vmax.f32 %v1796, 0.0
        %v1891 = vmax.f32 %v1801, 0.0
        %v1892 = vmax.f32 %v1806, 0.0
        %v1893 = vmax.f32 %v1811, 0.0
        %v1894 = vmax.f32 %v1816, 0.0
        %v1895 = vmax.f32 %v1821, 0.0
        %v1896 = vmax.f32 %v1826, 0.0
        %v1897 = vmax.f32 %v1831, 0.0
        %v1898 = vmax.f32 %v1836, 0.0
        %v1899 = vmax.f32 %v1841, 0.0
        %v1900 = vmax.f32 %v1846, 0.0
        %v1901 = vmax.f32 %v1851, 0.0
        %v1902 = vmax.f32 %v1856, 0.0
        %v1903 = vmax.f32 %v1861, 0.0
        %v1904 = vmax.f32 %v1866, 0.0
        %v1905 = vmax.f32 %v1871, 0.0
        %v1906 = vld [vmem:[%s2] sm:$0x3]
        %v1907 = vld [vmem:[%s3] sm:$0x3]
        %1909 = vset.pattern.permute.xlu0 0
        %1910 = vperm.xlu0 %1909, %v1907
        %v1911 = vpop.permute.xlu0 %1910
        %v1914 = vsel %vm1369, %v1906, 0
        %v1917 = vsel %vm1369, %v1874, 0
        %v1920 = vsel %vm1369, %v1875, 0
        %v1923 = vsel %vm1369, %v1876, 0
        %v1926 = vsel %vm1369, %v1877, 0
        %v1929 = vsel %vm1369, %v1878, 0
        %v1932 = vsel %vm1369, %v1879, 0
        %v1935 = vsel %vm1369, %v1880, 0
        %v1938 = vsel %vm1369, %v1881, 0
        %v1941 = vsel %vm1369, %v1882, 0
        %v1944 = vsel %vm1369, %v1883, 0
        %v1947 = vsel %vm1369, %v1884, 0
        %v1950 = vsel %vm1369, %v1885, 0
        %v1953 = vsel %vm1369, %v1886, 0
        %v1956 = vsel %vm1369, %v1887, 0
        %v1959 = vsel %vm1369, %v1888, 0
        %v1962 = vsel %vm1369, %v1889, 0
        %v1965 = vsel %vm1369, %v1890, 0
        %v1968 = vsel %vm1369, %v1891, 0
        %v1971 = vsel %vm1369, %v1892, 0
        %v1974 = vsel %vm1369, %v1893, 0
        %v1977 = vsel %vm1369, %v1894, 0
        %v1980 = vsel %vm1369, %v1895, 0
        %v1983 = vsel %vm1369, %v1896, 0
        %v1986 = vsel %vm1369, %v1897, 0
        %v1989 = vsel %vm1369, %v1898, 0
        %v1992 = vsel %vm1369, %v1899, 0
        %v1995 = vsel %vm1369, %v1900, 0
        %v1998 = vsel %vm1369, %v1901, 0
        %v2001 = vsel %vm1369, %v1902, 0
        %v2004 = vsel %vm1369, %v1903, 0
        %v2007 = vsel %vm1369, %v1904, 0
        %v2010 = vsel %vm1369, %v1905, 0
        %2012 = vmatprep.subr.mxu0 0.0
        %2013 = vmatpush1.xpose.msra.mxu0 %v1917
        %2014 = vmatprep.subr.mxu0 0.0
        %2015 = vmatpush1.xpose.msra.mxu0 %v1920
        %2016 = vmatprep.subr.mxu0 0.0
        %2017 = vmatpush1.xpose.msra.mxu0 %v1923
        %2018 = vmatprep.subr.mxu0 0.0
        %2019 = vmatpush1.xpose.msra.mxu0 %v1926
        %2020 = vmatprep.subr.mxu0 0.0
        %2021 = vmatpush1.xpose.msra.mxu0 %v1929
        %2022 = vmatprep.subr.mxu0 0.0
        %2023 = vmatpush1.xpose.msra.mxu0 %v1932
        %2024 = vmatprep.subr.mxu0 0.0
        %2025 = vmatpush1.xpose.msra.mxu0 %v1935
        %2026 = vmatprep.subr.mxu0 0.0
        %2027 = vmatpush1.xpose.msra.mxu0 %v1938
        %2028 = vmatprep.subr.mxu0 0.0
        %2029 = vmatpush1.xpose.msra.mxu0 %v1941
        %2030 = vmatprep.subr.mxu0 0.0
        %2031 = vmatpush1.xpose.msra.mxu0 %v1944
        %2032 = vmatprep.subr.mxu0 0.0
        %2033 = vmatpush1.xpose.msra.mxu0 %v1947
        %2034 = vmatprep.subr.mxu0 0.0
        %2035 = vmatpush1.xpose.msra.mxu0 %v1950
        %2036 = vmatprep.subr.mxu0 0.0
        %2037 = vmatpush1.xpose.msra.mxu0 %v1953
        %2038 = vmatprep.subr.mxu0 0.0
        %2039 = vmatpush1.xpose.msra.mxu0 %v1956
        %2040 = vmatprep.subr.mxu0 0.0
        %2041 = vmatpush1.xpose.msra.mxu0 %v1959
        %2042 = vmatprep.subr.mxu0 0.0
        %2043 = vmatpush1.xpose.msra.mxu0 %v1962
        %2044 = vmatprep.subr.mxu0 0.0
        %2045 = vmatpush1.xpose.msra.mxu0 %v1965
        %2046 = vmatprep.subr.mxu0 0.0
        %2047 = vmatpush1.xpose.msra.mxu0 %v1968
        %2048 = vmatprep.subr.mxu0 0.0
        %2049 = vmatpush1.xpose.msra.mxu0 %v1971
        %2050 = vmatprep.subr.mxu0 0.0
        %2051 = vmatpush1.xpose.msra.mxu0 %v1974
        %2052 = vmatprep.subr.mxu0 0.0
        %2053 = vmatpush1.xpose.msra.mxu0 %v1977
        %2054 = vmatprep.subr.mxu0 0.0
        %2055 = vmatpush1.xpose.msra.mxu0 %v1980
        %2056 = vmatprep.subr.mxu0 0.0
        %2057 = vmatpush1.xpose.msra.mxu0 %v1983
        %2058 = vmatprep.subr.mxu0 0.0
        %2059 = vmatpush1.xpose.msra.mxu0 %v1986
        %2060 = vmatprep.subr.mxu0 0.0
        %2061 = vmatpush1.xpose.msra.mxu0 %v1989
        %2062 = vmatprep.subr.mxu0 0.0
        %2063 = vmatpush1.xpose.msra.mxu0 %v1992
        %2064 = vmatprep.subr.mxu0 0.0
        %2065 = vmatpush1.xpose.msra.mxu0 %v1995
        %2066 = vmatprep.subr.mxu0 0.0
        %2067 = vmatpush1.xpose.msra.mxu0 %v1998
        %2068 = vmatprep.subr.mxu0 0.0
        %2069 = vmatpush1.xpose.msra.mxu0 %v2001
        %2070 = vmatprep.subr.mxu0 0.0
        %2071 = vmatpush1.xpose.msra.mxu0 %v2004
        %2072 = vmatprep.subr.mxu0 0.0
        %2073 = vmatpush1.xpose.msra.mxu0 %v2007
        %2074 = vmatprep.subr.mxu0 0.0
        %2075 = vmatpush1.xpose.msra.mxu0 %v2010
        %2076 = vmatprep.mubr.f32.mxu0 0.0
        %2077 = vmatmul.mubr.f32.gmra.mrb[0].mxu0 %v1914
        %v2078 = vpop.f32.mrb[0].mxu0
        %v2079 = vadd.f32 %v1911, %v2078
        %v2080 = vpop.f32.mrb[0].mxu0
        %v2081 = vadd.f32 %v1911, %v2080
        %2082 = vdwg.mxu0
        %v2085 = vcombine.low %v2079, %v2081
        %v2087 = vunpack.c.l.s4 1983009808
        %v2088 = vunpack.c.0.s8 %v2087
        %v2089 = vlaneseq
        %v2090 = vshrl.u32 %v2089, 7
        %v2091 = vsub.s32 %v2088, %v2090
        %v2092 = vrot.slane %v2085, %v2091
        %2094 = vst [vmem:[%s215] sm:$0xf] %v2092
        %s2095 = sand.u32 %s118, 1
        %s2096 = scalar_lea.sflag [#allocation5], %s2095
        %s2097 = sand.u32 %s118, 1
        %s2098 = smul.addr %s2097, 4
        %s2099 = scalar_lea.vmem [#allocation6], %s2098
        // Predicated region
        $region41: #{tpu_custom_call.1} parent=35 // pred_check
          %p2100 = pneg %p128
        $region42: #{tpu_custom_call.1} parent=35 // pred_check_branch
          %2102 = sbr.rel (%p2100) target = $region44
        $region43: #{tpu_custom_call.1} parent=35 // pred_region
          %s2104 = ssub.s32 64, 64
          %2105 = vsyncadd %s2096, %s2104
          %s2106 = smul.addr %s21, 2
          %s2107 = smul.addr %s2106, 32
          %s2108 = scalar_lea.hbm %s4, %s2107
          %s2110 = sshll.u32 %s2099, 4
          %s2111 = int_to_ptr.vmem [resolvable:$true] %s2110
          %2113 = dma.vmem_to_hbm [thread:$0]  %s2111, 64, %s2108, %s2096
        $region44: #{tpu_custom_call.1} parent=35 // pred_fallthru
          _
      $region36: #{tpu_custom_call.1} parent=5 // pred_fallthru
        _
      %p2114 = scmp.le.s32.totalorder 2, %s16
      // Predicated region
      $region45: #{tpu_custom_call.1} parent=5 // pred_check
        %p2115 = pneg %p2114
      $region46: #{tpu_custom_call.1} parent=5 // pred_check_branch
        %2117 = sbr.rel (%p2115) target = $region48
      $region47: #{tpu_custom_call.1} parent=5 // pred_region
        %s2118 = ssub.s32 %s16, 2
        // Predicated region
        $region49: #{tpu_custom_call.1} parent=47 // pred_check
          %p2119 = pneg %p134
        $region50: #{tpu_custom_call.1} parent=47 // pred_check_branch
          %2121 = sbr.rel (%p2119) target = $region52
        $region51: #{tpu_custom_call.1} parent=47 // pred_region
          %s2122 = sand.u32 %s119, 1
          %s2123 = scalar_lea.sflag [#allocation5], %s2122
          %s2124 = sand.u32 %s119, 1
          %s2125 = smul.addr %s2124, 4
          %s2126 = scalar_lea.vmem [#allocation6], %s2125
          %2127 = dma.done %s2123, 64
        $region52: #{tpu_custom_call.1} parent=47 // pred_fallthru
          _
      $region48: #{tpu_custom_call.1} parent=5 // pred_fallthru
        _
    $region6: #{tpu_custom_call.1} parent=1 // loop_footer
      %s20 = sadd.s32 1, %s16
    $region7: #{tpu_custom_call.1} parent=1 // loop_footer_branch
      %15 = sbr.rel target = $region3
    $region8: #{tpu_custom_call.1} parent=1 // loop_exit
      _
    %2128 = vsyncpa [#allocation4], 1
    %s2129 = scalar_lea.sflag [#allocation4], 1
    %2130 = vsyncpa %s2129, 1
    %2131 = vsyncpa [#allocation5], 1
    %s2132 = scalar_lea.sflag [#allocation5], 1
    %2133 = vsyncpa %s2132, 1

</llo_original>
